<compile_context>
chip_gen: v6e
topology: v6e:2x2x1
jax: 0.10.0
libtpu: 0.0.40
codegen_flags: <defaults>
</compile_context>

<pallas_src>
import functools

import jax
import jax.numpy as jnp
from jax import lax
from jax.experimental import pallas as pl
from jax.experimental.pallas import tpu as pltpu

_NEG_INF = -1e30


def _round_up(x, m):
    return ((x + m - 1) // m) * m


def _pick_tile(dim, cap):
    """dim is a multiple of 128; largest multiple of 128 <= cap dividing dim."""
    best = 128
    t = 128
    while t <= min(dim, cap):
        if dim % t == 0:
            best = t
        t += 128
    return best


def _pick_row_tile(np_dim, cap):
    """Row tile; prefer >=2 row tiles so the 'parallel' axis can feed 2 TCs (v7x)."""
    tm = _pick_tile(np_dim, cap)
    if np_dim // tm < 2 and np_dim >= 256:
        tm = _pick_tile(np_dim, max(128, np_dim // 2))
    return tm


def _pad2(a, rows, cols):
    r, c = a.shape
    return jnp.pad(a, ((0, rows - r), (0, cols - c)))


def _vmem_budget_bytes():
    """Generation-aware VMEM request cap (v5e/v6e: 128 MiB, v7x: 64 MiB physical)."""
    cap = 64 << 20
    try:
        cap = int(pltpu.get_tpu_info().vmem_capacity_bytes)
    except Exception:
        pass
    return min(100 << 20, int(cap * 0.85))


# ----------------------------------------------------------------------------
# Tiled matmul kernel: grid = (row blocks [parallel], reduction blocks [arbitrary])
# f32 accumulator scratch stays resident across the reduction axis.
# ----------------------------------------------------------------------------
def _matmul_kernel(a_ref, b_ref, o_ref, acc_ref):
    @pl.when(pl.program_id(1) == 0)
    def _init():
        acc_ref[...] = jnp.zeros_like(acc_ref)

    acc_ref[...] += jnp.dot(a_ref[...], b_ref[...],
                            preferred_element_type=jnp.float32)

    @pl.when(pl.program_id(1) == pl.num_programs(1) - 1)
    def _store():
        o_ref[...] = acc_ref[...].astype(o_ref.dtype)


def _tiled_matmul(a, b, *, out_dtype, tm, tk_cap=1024, vmem_budget=None):
    """C = A @ B with A:[M,K], B:[K,Nw]; M % tm == 0, K a multiple of 128."""
    M, Kd = a.shape
    Kd2, Nw = b.shape
    assert Kd == Kd2 and M % tm == 0
    if vmem_budget is None:
        vmem_budget = _vmem_budget_bytes()
    tk = _pick_tile(Kd, tk_cap)
    grid = (M // tm, Kd // tk)

    out_isz = jnp.dtype(out_dtype).itemsize
    block_bytes = (tm * tk * a.dtype.itemsize
                   + tk * Nw * b.dtype.itemsize
                   + tm * Nw * out_isz)
    vmem = (2 * block_bytes + tm * Nw * 4) * 5 // 4 + (4 << 20)
    vmem = min(max(int(vmem), 8 << 20), vmem_budget)

    cost = pl.CostEstimate(
        flops=int(2 * M * Kd * Nw),
        transcendentals=0,
        bytes_accessed=int(a.size * a.dtype.itemsize
                           + b.size * b.dtype.itemsize * (M // tm)
                           + M * Nw * out_isz),
    )

    return pl.pallas_call(
        _matmul_kernel,
        out_shape=jax.ShapeDtypeStruct((M, Nw), out_dtype),
        grid_spec=pltpu.PrefetchScalarGridSpec(
            num_scalar_prefetch=0,
            grid=grid,
            in_specs=[
                pl.BlockSpec((tm, tk), lambda i, k: (i, k)),   # A row/reduction tile
                pl.BlockSpec((tk, Nw), lambda i, k: (k, 0)),   # B reduction slab
            ],
            out_specs=pl.BlockSpec((tm, Nw), lambda i, k: (i, 0)),
            scratch_shapes=[pltpu.VMEM((tm, Nw), jnp.float32)],
        ),
        compiler_params=pltpu.CompilerParams(
            dimension_semantics=("parallel", "arbitrary"),
            vmem_limit_bytes=vmem,
        ),
        cost_estimate=cost,
    )(a, b)


# ----------------------------------------------------------------------------
# Shared head math: (optional W1) + bias + ReLU + W2 + bias + masked log_softmax.
# Matmul operands in compute_dtype (bf16 default) with f32 accumulation.
# ----------------------------------------------------------------------------
def _head_math(h, w1, b1, w2, b2, *, num_classes, compute_dtype):
    if w1 is not None:
        z = jnp.dot(h, w1, preferred_element_type=jnp.float32)
    else:
        z = h.astype(jnp.float32)
    z = jnp.maximum(z + b1, 0.0)
    logits = jnp.dot(z.astype(compute_dtype), w2,
                     preferred_element_type=jnp.float32) + b2

    # Mask padded class lanes so the softmax normalizer only sees real classes.
    lane = lax.broadcasted_iota(jnp.int32, logits.shape, 1)
    logits = jnp.where(lane < num_classes, logits, jnp.float32(_NEG_INF))

    m = jnp.max(logits, axis=1, keepdims=True)
    shifted = logits - m
    lse = jnp.log(jnp.sum(jnp.exp(shifted), axis=1, keepdims=True))
    return shifted - lse


# ----------------------------------------------------------------------------
# Fallback head kernel (row-tiled), used when propagation runs per-hop tiled.
# ----------------------------------------------------------------------------
def _head_kernel(*refs, apply_w1, num_classes, compute_dtype):
    if apply_w1:
        h_ref, w1_ref, b1_ref, w2_ref, b2_ref, o_ref = refs
        w1 = w1_ref[...]
    else:
        h_ref, b1_ref, w2_ref, b2_ref, o_ref = refs
        w1 = None
    o_ref[...] = _head_math(h_ref[...], w1, b1_ref[...], w2_ref[...], b2_ref[...],
                            num_classes=num_classes, compute_dtype=compute_dtype)


def _head_call(h, w1, b1, w2, b2, *, tm, num_classes, vmem_budget=None):
    Np, Wp = h.shape
    Hp = b1.shape[1]
    Cp = b2.shape[1]
    apply_w1 = w1 is not None
    compute_dtype = h.dtype
    psz = jnp.dtype(compute_dtype).itemsize
    if vmem_budget is None:
        vmem_budget = _vmem_budget_bytes()

    in_specs = [pl.BlockSpec((tm, Wp), lambda i: (i, 0))]
    operands = [h]
    if apply_w1:
        in_specs.append(pl.BlockSpec((Wp, Hp), lambda i: (0, 0)))
        operands.append(w1)
    in_specs += [
        pl.BlockSpec((1, Hp), lambda i: (0, 0)),
        pl.BlockSpec((Hp, Cp), lambda i: (0, 0)),
        pl.BlockSpec((1, Cp), lambda i: (0, 0)),
    ]
    operands += [b1, w2, b2]

    block_bytes = (tm * Wp * psz
                   + (Wp * Hp * psz if apply_w1 else 0)
                   + Hp * 4 + Hp * Cp * psz + Cp * 4
                   + tm * Cp * 4)
    vmem = int(2 * block_bytes + 3 * tm * (Hp + Cp) * 4) + (4 << 20)
    vmem = min(max(vmem, 8 << 20), vmem_budget)

    flops = Np * ((2 * Wp * Hp) if apply_w1 else 0) + 2 * Np * Hp * Cp
    cost = pl.CostEstimate(
        flops=int(flops),
        transcendentals=int(Np * Cp + Np),
        bytes_accessed=int(h.size * psz + Np * Cp * 4),
    )

    return pl.pallas_call(
        functools.partial(_head_kernel, apply_w1=apply_w1,
                          num_classes=num_classes, compute_dtype=compute_dtype),
        out_shape=jax.ShapeDtypeStruct((Np, Cp), jnp.float32),
        grid_spec=pltpu.PrefetchScalarGridSpec(
            num_scalar_prefetch=0,
            grid=(Np // tm,),
            in_specs=in_specs,
            out_specs=pl.BlockSpec((tm, Cp), lambda i: (i, 0)),
        ),
        compiler_params=pltpu.CompilerParams(
            dimension_semantics=("parallel",),
            vmem_limit_bytes=vmem,
        ),
        cost_estimate=cost,
    )(*operands)


# ----------------------------------------------------------------------------
# Fused propagation + head kernel: S DMA'd from HBM into VMEM once, K hops on
# ping-pong VMEM buffers, head epilogue fused in (no H round trip to HBM).
# ----------------------------------------------------------------------------
def _fused_prop_head_kernel(*refs, K, apply_w1, num_classes, prop_dtype):
    if apply_w1:
        (s_hbm, h0_ref, w1_ref, b1_ref, w2_ref, b2_ref,
         o_ref, s_vmem, h_a, h_b, sem) = refs
        w1 = w1_ref[...]
    else:
        (s_hbm, h0_ref, b1_ref, w2_ref, b2_ref,
         o_ref, s_vmem, h_a, h_b, sem) = refs
        w1 = None

    # Load S into VMEM once; all K hops reuse it (K x fewer HBM reads of S).
    cp = pltpu.make_async_copy(s_hbm, s_vmem, sem.at[0])
    cp.start()
    cp.wait()

    bufs = (h_a, h_b)
    h_a[...] = h0_ref[...]
    for k in range(K):                       # K is static -> unrolled hops
        src = bufs[k % 2]
        dst = bufs[(k + 1) % 2]
        dst[...] = jnp.dot(s_vmem[...], src[...],
                           preferred_element_type=jnp.float32).astype(prop_dtype)
    h = bufs[K % 2][...]

    o_ref[...] = _head_math(h, w1, b1_ref[...], w2_ref[...], b2_ref[...],
                            num_classes=num_classes, compute_dtype=prop_dtype)


def _fused_vmem_estimate(Np, Wp, Hp, Cp, psz, apply_w1):
    est = Np * Np * psz                       # resident S scratch
    est += 2 * Np * Wp * psz                  # ping/pong H scratch
    est += 2 * Np * Wp * psz                  # double-buffered h0 input
    est += 2 * Np * Cp * 4                    # double-buffered f32 output
    est += Np * Wp * 4                        # transient f32 hop result
    est += Np * Hp * 4 + Np * Hp * psz        # head pre-activation + cast
    est += 4 * Np * Cp * 4                    # logits / softmax temporaries
    est += 2 * ((Wp * Hp * psz) if apply_w1 else 0)
    est += 2 * (Hp * Cp * psz + (Hp + Cp) * 4)
    est += 4 << 20                            # headroom for internal scratch
    return int(est)


def _fused_call(s_p, h0, w1, b1, w2, b2, *, K, num_classes, vmem_limit):
    Np, Wp = h0.shape
    Hp = b1.shape[1]
    Cp = b2.shape[1]
    apply_w1 = w1 is not None
    pdt = h0.dtype

    in_specs = [pl.BlockSpec(memory_space=pl.ANY),              # S stays in HBM
                pl.BlockSpec((Np, Wp), lambda i: (0, 0))]
    operands = [s_p, h0]
    if apply_w1:
        in_specs.append(pl.BlockSpec((Wp, Hp), lambda i: (0, 0)))
        operands.append(w1)
    in_specs += [
        pl.BlockSpec((1, Hp), lambda i: (0, 0)),
        pl.BlockSpec((Hp, Cp), lambda i: (0, 0)),
        pl.BlockSpec((1, Cp), lambda i: (0, 0)),
    ]
    operands += [b1, w2, b2]

    flops = (2 * K * Np * Np * Wp
             + (2 * Np * Wp * Hp if apply_w1 else 0)
             + 2 * Np * Hp * Cp)
    cost = pl.CostEstimate(
        flops=int(flops),
        transcendentals=int(Np * Cp + Np),
        bytes_accessed=int(s_p.size * s_p.dtype.itemsize
                           + h0.size * h0.dtype.itemsize + Np * Cp * 4),
    )

    return pl.pallas_call(
        functools.partial(_fused_prop_head_kernel, K=K, apply_w1=apply_w1,
                          num_classes=num_classes, prop_dtype=pdt),
        out_shape=jax.ShapeDtypeStruct((Np, Cp), jnp.float32),
        grid_spec=pltpu.PrefetchScalarGridSpec(
            num_scalar_prefetch=0,
            grid=(1,),
            in_specs=in_specs,
            out_specs=pl.BlockSpec((Np, Cp), lambda i: (0, 0)),
            scratch_shapes=[
                pltpu.VMEM((Np, Np), pdt),        # resident S
                pltpu.VMEM((Np, Wp), pdt),        # ping
                pltpu.VMEM((Np, Wp), pdt),        # pong
                pltpu.SemaphoreType.DMA((1,)),
            ],
        ),
        compiler_params=pltpu.CompilerParams(
            dimension_semantics=("arbitrary",),
            vmem_limit_bytes=vmem_limit,
        ),
        cost_estimate=cost,
    )(*operands)


# ----------------------------------------------------------------------------
# Full forward pass.
# ----------------------------------------------------------------------------
def gfnn_forward(x, s, w1, b1, w2, b2, *, K, tile_n=512, tk_cap=1024,
                 prop_dtype=jnp.bfloat16, use_fused=None):
    """GFNN forward: log_softmax(relu(S^K X W1 + b1) W2 + b2).

    x  : [N, F] features         s : [N, N] dense D^-1/2 (A+I) D^-1/2
    w1 : [F, nhid], b1 : [1, nhid], w2 : [nhid, C], b2 : [1, C]
    """
    N, feat_dim = x.shape
    nhid = w1.shape[1]
    C = w2.shape[1]
    psz = jnp.dtype(prop_dtype).itemsize

    Fp = _round_up(feat_dim, 128)
    Hp = _round_up(nhid, 128)
    Cp = _round_up(C, 128)

    # Apply the SGConv linear before propagation when it shrinks the prop width.
    pre_transform = feat_dim > nhid
    Wp = Hp if pre_transform else Fp          # propagation width

    budget = _vmem_budget_bytes()             # generation-aware (v7x: 64 MiB phys)

    Np_fused = _round_up(N, 128)
    fused_est = _fused_vmem_estimate(Np_fused, Wp, Hp, Cp, psz,
                                     apply_w1=not pre_transform)
    if use_fused is None:
        use_fused = fused_est <= budget

    # Fused path only needs 128-alignment; tiled fallback pads N up to the row
    # tile so propagation always runs with >=512-wide DMA-efficient tiles.
    Np = Np_fused if use_fused else _round_up(N, tile_n)
    tm = _pick_row_tile(Np, tile_n)

    # Pad to lane/sublane-friendly shapes; cast to the matmul compute dtype up
    # front so every MXU matmul is bf16-in / f32-accumulate by default.
    x_p = _pad2(x.astype(prop_dtype), Np, Fp)
    s_p = _pad2(s.astype(prop_dtype), Np, Np)
    w1_p = _pad2(w1.astype(prop_dtype), Fp, Hp)
    b1_p = _pad2(b1.reshape(1, -1).astype(jnp.float32), 1, Hp)
    w2_p = _pad2(w2.astype(prop_dtype), Hp, Cp)
    b2_p = _pad2(b2.reshape(1, -1).astype(jnp.float32), 1, Cp)

    if pre_transform:
        h0 = _tiled_matmul(x_p, w1_p, out_dtype=prop_dtype, tm=tm,
                           tk_cap=tk_cap, vmem_budget=budget)
    else:
        h0 = x_p

    if use_fused:
        out_p = _fused_call(s_p, h0,
                            None if pre_transform else w1_p,
                            b1_p, w2_p, b2_p,
                            K=K, num_classes=C, vmem_limit=budget)
    else:
        h = h0
        for _ in range(K):                    # K static -> one tiled matmul per hop
            h = _tiled_matmul(s_p, h, out_dtype=prop_dtype, tm=tm,
                              tk_cap=tk_cap, vmem_budget=budget)
        out_p = _head_call(h,
                           None if pre_transform else w1_p,
                           b1_p, w2_p, b2_p,
                           tm=tm, num_classes=C, vmem_budget=budget)
    return out_p[:N, :C]


def build_norm_adj(edge_index, num_nodes):
    """Dense D^-1/2 (A + I) D^-1/2 as used by PyG gcn_norm (add_self_loops)."""
    a = jnp.zeros((num_nodes, num_nodes), jnp.float32)
    a = a.at[edge_index[0], edge_index[1]].set(1.0)
    a = a + jnp.eye(num_nodes, dtype=jnp.float32)
    deg = a.sum(axis=1)
    dinv = jnp.where(deg > 0, 1.0 / jnp.sqrt(deg), 0.0)
    return dinv[:, None] * a * dinv[None, :]


if __name__ == "__main__":

    def run_case(name, N, F, NHID, C, K, seed, use_fused=None):
        key = jax.random.PRNGKey(seed)
        kx, ke, kw1, kb1, kw2, kb2 = jax.random.split(key, 6)

        x = jax.random.normal(kx, (N, F), jnp.float32)

        n_edges = 4 * N
        src = jax.random.randint(ke, (n_edges,), 0, N)
        dst = jax.random.randint(jax.random.fold_in(ke, 1), (n_edges,), 0, N)
        edge_index = jnp.stack(
            [jnp.concatenate([src, dst]), jnp.concatenate([dst, src])], axis=0)
        s = build_norm_adj(edge_index, N)

        w1 = jax.random.uniform(kw1, (F, NHID), jnp.float32, -1.0, 1.0) / jnp.sqrt(F)
        b1 = jax.random.uniform(kb1, (1, NHID), jnp.float32, -1.0, 1.0) / jnp.sqrt(F)
        w2 = jax.random.uniform(kw2, (NHID, C), jnp.float32, -1.0, 1.0) / jnp.sqrt(NHID)
        b2 = jax.random.uniform(kb2, (1, C), jnp.float32, -1.0, 1.0) / jnp.sqrt(NHID)

        # Exact f32 reference following the module: S^K X, linear, ReLU, fc, log_softmax.
        h = x
        for _ in range(K):
            h = s @ h
        ref = jax.nn.log_softmax(jnp.maximum(h @ w1 + b1, 0.0) @ w2 + b2, axis=1)

        # f32 propagation: tight numerical check.
        out_f32 = jax.block_until_ready(
            gfnn_forward(x, s, w1, b1, w2, b2, K=K, prop_dtype=jnp.float32,
                         use_fused=use_fused))
        assert out_f32.shape == (N, C), name
        assert jnp.allclose(out_f32, ref, atol=1e-4, rtol=1e-4), name

        # bf16 propagation (default, MXU-native): relaxed tolerance.
        out_bf16 = jax.block_until_ready(
            gfnn_forward(x, s, w1, b1, w2, b2, K=K, use_fused=use_fused))
        assert out_bf16.shape == (N, C), name
        assert jnp.allclose(out_bf16, ref, atol=5e-2, rtol=5e-2), name

    # Case 1: F < nhid (linear applied after propagation), fused S-resident path.
    run_case("post_linear_fused", N=16, F=8, NHID=32, C=4, K=2, seed=0)
    # Case 2: F > nhid (linear hoisted before propagation via associativity), fused.
    run_case("pre_linear_fused", N=24, F=64, NHID=16, C=3, K=2, seed=1)
    # Case 3: force the tiled fallback path (per-hop matmuls + separate head kernel).
    run_case("post_linear_tiled", N=16, F=8, NHID=32, C=4, K=2, seed=0, use_fused=False)

    print("KERNEL_OK")
</pallas_src>

<mosaic_0001>
module attributes {stable_mosaic.version = 11 : i64} {
  func.func @_fused_prop_head_kernel(%arg0: i32, %arg1: memref<128x128xf32, #tpu.memory_space<any>>, %arg2: memref<128x128xf32, #tpu.memory_space<vmem>>, %arg3: memref<128x128xf32, #tpu.memory_space<vmem>>, %arg4: memref<1x128xf32, #tpu.memory_space<vmem>>, %arg5: memref<128x128xf32, #tpu.memory_space<vmem>>, %arg6: memref<1x128xf32, #tpu.memory_space<vmem>>, %arg7: memref<128x128xf32, #tpu.memory_space<vmem>>, %arg8: memref<128x128xf32, #tpu.memory_space<vmem>>, %arg9: memref<128x128xf32, #tpu.memory_space<vmem>>, %arg10: memref<128x128xf32, #tpu.memory_space<vmem>>, %arg11: memref<1x!tpu.dma_semaphore, #tpu.memory_space<semaphore_mem>>) attributes {dimension_semantics = [#tpu.dimension_semantics<arbitrary>], iteration_bounds = array<i64: 1>, scalar_prefetch = 0 : i64, scratch_operands = 4 : i64, tpu.core_type = #tpu.core_type<tc>, window_params = [{}, {pipeline_mode = #tpu.pipeline_mode<synchronous>, transform_indices = @transform_1, window_bounds = array<i64: 128, 128>}, {pipeline_mode = #tpu.pipeline_mode<synchronous>, transform_indices = @transform_2, window_bounds = array<i64: 128, 128>}, {pipeline_mode = #tpu.pipeline_mode<synchronous>, transform_indices = @transform_3, window_bounds = array<i64: 1, 128>}, {pipeline_mode = #tpu.pipeline_mode<synchronous>, transform_indices = @transform_4, window_bounds = array<i64: 128, 128>}, {pipeline_mode = #tpu.pipeline_mode<synchronous>, transform_indices = @transform_5, window_bounds = array<i64: 1, 128>}, {pipeline_mode = #tpu.pipeline_mode<synchronous>, transform_indices = @transform_6, window_bounds = array<i64: 128, 128>}]} {
    %c0 = arith.constant 0 : index
    %c0_0 = arith.constant 0 : index
    %0 = vector.load %arg3[%c0, %c0_0] : memref<128x128xf32, #tpu.memory_space<vmem>>, vector<128x128xf32>
    %c0_i32 = arith.constant 0 : i32
    %1 = tpu.memref_slice %arg11[%c0_i32] : memref<1x!tpu.dma_semaphore, #tpu.memory_space<semaphore_mem>> -> memref<1x!tpu.dma_semaphore, #tpu.memory_space<semaphore_mem>>
    %2 = tpu.memref_squeeze %1 : memref<1x!tpu.dma_semaphore, #tpu.memory_space<semaphore_mem>> -> memref<!tpu.dma_semaphore, #tpu.memory_space<semaphore_mem>>
    tpu.enqueue_dma source(%arg1 : memref<128x128xf32, #tpu.memory_space<any>>) target(%arg8 : memref<128x128xf32, #tpu.memory_space<vmem>>) target_semaphore(%2 : memref<!tpu.dma_semaphore, #tpu.memory_space<semaphore_mem>>)
    %c0_i32_1 = arith.constant 0 : i32
    %3 = tpu.memref_slice %arg11[%c0_i32_1] : memref<1x!tpu.dma_semaphore, #tpu.memory_space<semaphore_mem>> -> memref<1x!tpu.dma_semaphore, #tpu.memory_space<semaphore_mem>>
    %4 = tpu.memref_squeeze %3 : memref<1x!tpu.dma_semaphore, #tpu.memory_space<semaphore_mem>> -> memref<!tpu.dma_semaphore, #tpu.memory_space<semaphore_mem>>
    tpu.wait_dma2 semaphore(%4 : memref<!tpu.dma_semaphore, #tpu.memory_space<semaphore_mem>>) src(%arg1 : memref<128x128xf32, #tpu.memory_space<any>>) dst(%arg8 : memref<128x128xf32, #tpu.memory_space<vmem>>)
    %c0_2 = arith.constant 0 : index
    %c0_3 = arith.constant 0 : index
    %5 = vector.load %arg2[%c0_2, %c0_3] : memref<128x128xf32, #tpu.memory_space<vmem>>, vector<128x128xf32>
    %c0_4 = arith.constant 0 : index
    %c0_5 = arith.constant 0 : index
    %6 = vector.load %arg9[%c0_4, %c0_5] : memref<128x128xf32, #tpu.memory_space<vmem>>, vector<128x128xf32>
    tpu.vector_store %arg9[%c0_4, %c0_5], %5 {strides = array<i32>} : memref<128x128xf32, #tpu.memory_space<vmem>>, vector<128x128xf32>,
    %c0_6 = arith.constant 0 : index
    %c0_7 = arith.constant 0 : index
    %7 = vector.load %arg8[%c0_6, %c0_7] : memref<128x128xf32, #tpu.memory_space<vmem>>, vector<128x128xf32>
    %c0_8 = arith.constant 0 : index
    %c0_9 = arith.constant 0 : index
    %8 = vector.load %arg9[%c0_8, %c0_9] : memref<128x128xf32, #tpu.memory_space<vmem>>, vector<128x128xf32>
    %cst = arith.constant dense<0.000000e+00> : vector<128x128xf32>
    %9 = tpu.matmul %7, %8, %cst {dimension_numbers = #tpu.dot_dimension_numbers<[1], [0], [0], [1], [0, 0, 1, 1], [], []>} : vector<128x128xf32>, vector<128x128xf32>, vector<128x128xf32> -> vector<128x128xf32>
    %c0_10 = arith.constant 0 : index
    %c0_11 = arith.constant 0 : index
    %10 = vector.load %arg10[%c0_10, %c0_11] : memref<128x128xf32, #tpu.memory_space<vmem>>, vector<128x128xf32>
    tpu.vector_store %arg10[%c0_10, %c0_11], %9 {strides = array<i32>} : memref<128x128xf32, #tpu.memory_space<vmem>>, vector<128x128xf32>,
    %c0_12 = arith.constant 0 : index
    %c0_13 = arith.constant 0 : index
    %11 = vector.load %arg8[%c0_12, %c0_13] : memref<128x128xf32, #tpu.memory_space<vmem>>, vector<128x128xf32>
    %c0_14 = arith.constant 0 : index
    %c0_15 = arith.constant 0 : index
    %12 = vector.load %arg10[%c0_14, %c0_15] : memref<128x128xf32, #tpu.memory_space<vmem>>, vector<128x128xf32>
    %cst_16 = arith.constant dense<0.000000e+00> : vector<128x128xf32>
    %13 = tpu.matmul %11, %12, %cst_16 {dimension_numbers = #tpu.dot_dimension_numbers<[1], [0], [0], [1], [0, 0, 1, 1], [], []>} : vector<128x128xf32>, vector<128x128xf32>, vector<128x128xf32> -> vector<128x128xf32>
    %c0_17 = arith.constant 0 : index
    %c0_18 = arith.constant 0 : index
    %14 = vector.load %arg9[%c0_17, %c0_18] : memref<128x128xf32, #tpu.memory_space<vmem>>, vector<128x128xf32>
    tpu.vector_store %arg9[%c0_17, %c0_18], %13 {strides = array<i32>} : memref<128x128xf32, #tpu.memory_space<vmem>>, vector<128x128xf32>,
    %c0_19 = arith.constant 0 : index
    %c0_20 = arith.constant 0 : index
    %15 = vector.load %arg9[%c0_19, %c0_20] : memref<128x128xf32, #tpu.memory_space<vmem>>, vector<128x128xf32>
    %c0_21 = arith.constant 0 : index
    %c0_22 = arith.constant 0 : index
    %16 = vector.load %arg4[%c0_21, %c0_22] : memref<1x128xf32, #tpu.memory_space<vmem>>, vector<1x128xf32>
    %c0_23 = arith.constant 0 : index
    %c0_24 = arith.constant 0 : index
    %17 = vector.load %arg5[%c0_23, %c0_24] : memref<128x128xf32, #tpu.memory_space<vmem>>, vector<128x128xf32>
    %c0_25 = arith.constant 0 : index
    %c0_26 = arith.constant 0 : index
    %18 = vector.load %arg6[%c0_25, %c0_26] : memref<1x128xf32, #tpu.memory_space<vmem>>, vector<1x128xf32>
    %cst_27 = arith.constant dense<0.000000e+00> : vector<128x128xf32>
    %19 = tpu.matmul %15, %0, %cst_27 {dimension_numbers = #tpu.dot_dimension_numbers<[1], [0], [0], [1], [0, 0, 1, 1], [], []>} : vector<128x128xf32>, vector<128x128xf32>, vector<128x128xf32> -> vector<128x128xf32>
    %20 = vector.broadcast %16 : vector<1x128xf32> to vector<128x128xf32>
    %21 = arith.addf %19, %20 : vector<128x128xf32>
    %cst_28 = arith.constant 0.000000e+00 : f32
    %22 = vector.broadcast %cst_28 : f32 to vector<128x128xf32>
    %23 = arith.maximumf %21, %22 : vector<128x128xf32>
    %cst_29 = arith.constant dense<0.000000e+00> : vector<128x128xf32>
    %24 = tpu.matmul %23, %17, %cst_29 {dimension_numbers = #tpu.dot_dimension_numbers<[1], [0], [0], [1], [0, 0, 1, 1], [], []>} : vector<128x128xf32>, vector<128x128xf32>, vector<128x128xf32> -> vector<128x128xf32>
    %25 = vector.broadcast %18 : vector<1x128xf32> to vector<128x128xf32>
    %26 = arith.addf %24, %25 : vector<128x128xf32>
    %27 = tpu.iota {dimensions = array<i32: 1>} : vector<128x128xi32>
    %c4_i32 = arith.constant 4 : i32
    %28 = vector.broadcast %c4_i32 : i32 to vector<128x128xi32>
    %29 = arith.cmpi slt, %27, %28 : vector<128x128xi32>
    %cst_30 = arith.constant -1.000000e+30 : f32
    %30 = vector.broadcast %cst_30 : f32 to vector<128x128xf32>
    %31 = arith.select %29, %26, %30 : vector<128x128xi1>, vector<128x128xf32>
    %cst_31 = arith.constant dense<0xFF800000> : vector<128xf32>
    %32 = vector.multi_reduction <maximumf>, %31, %cst_31 [1] : vector<128x128xf32> to vector<128xf32>
    %33 = vector.shape_cast %32 : vector<128xf32> to vector<128x1xf32>
    %34 = vector.broadcast %33 : vector<128x1xf32> to vector<128x128xf32>
    %35 = arith.subf %31, %34 : vector<128x128xf32>
    %36 = math.exp %35 : vector<128x128xf32>
    %cst_32 = arith.constant dense<0.000000e+00> : vector<128xf32>
    %37 = vector.multi_reduction <add>, %36, %cst_32 [1] : vector<128x128xf32> to vector<128xf32>
    %38 = vector.shape_cast %37 : vector<128xf32> to vector<128x1xf32>
    %39 = math.log %38 : vector<128x1xf32>
    %40 = vector.broadcast %39 : vector<128x1xf32> to vector<128x128xf32>
    %41 = arith.subf %35, %40 : vector<128x128xf32>
    %c0_33 = arith.constant 0 : index
    %c0_34 = arith.constant 0 : index
    %42 = vector.load %arg7[%c0_33, %c0_34] : memref<128x128xf32, #tpu.memory_space<vmem>>, vector<128x128xf32>
    tpu.vector_store %arg7[%c0_33, %c0_34], %41 {strides = array<i32>} : memref<128x128xf32, #tpu.memory_space<vmem>>, vector<128x128xf32>,
    return
  }
  func.func @transform_1(%arg0: i32) -> (i32, i32) {
    %c0_i32 = arith.constant 0 : i32
    %c0_i32_0 = arith.constant 0 : i32
    %c0_i32_1 = arith.constant 0 : i32
    return %c0_i32, %c0_i32_0 : i32, i32
  }
  func.func @transform_2(%arg0: i32) -> (i32, i32) {
    %c0_i32 = arith.constant 0 : i32
    %c0_i32_0 = arith.constant 0 : i32
    %c0_i32_1 = arith.constant 0 : i32
    return %c0_i32, %c0_i32_0 : i32, i32
  }
  func.func @transform_3(%arg0: i32) -> (i32, i32) {
    %c0_i32 = arith.constant 0 : i32
    %c0_i32_0 = arith.constant 0 : i32
    %c0_i32_1 = arith.constant 0 : i32
    return %c0_i32, %c0_i32_0 : i32, i32
  }
  func.func @transform_4(%arg0: i32) -> (i32, i32) {
    %c0_i32 = arith.constant 0 : i32
    %c0_i32_0 = arith.constant 0 : i32
    %c0_i32_1 = arith.constant 0 : i32
    return %c0_i32, %c0_i32_0 : i32, i32
  }
  func.func @transform_5(%arg0: i32) -> (i32, i32) {
    %c0_i32 = arith.constant 0 : i32
    %c0_i32_0 = arith.constant 0 : i32
    %c0_i32_1 = arith.constant 0 : i32
    return %c0_i32, %c0_i32_0 : i32, i32
  }
  func.func @transform_6(%arg0: i32) -> (i32, i32) {
    %c0_i32 = arith.constant 0 : i32
    %c0_i32_0 = arith.constant 0 : i32
    %c0_i32_1 = arith.constant 0 : i32
    return %c0_i32, %c0_i32_0 : i32, i32
  }
}

</mosaic_0001>

<llo_original>
// kernel: tpu_custom_call.1
$region0: #{tpu_custom_call.1}
  #allocation0 [shape = 'u32[]', space=smem, size = 0x4, offset = 0x4, fixed_abs, tag = 'smem constant byte address 0x4 - core index']
  #allocation1 [shape = 'u32[144,128]{1,0:T(1,128)}', space=vmem, size = 0x12000, scoped, tag = 'internal scratch']
  #allocation2 [shape = 'f32[128,128]{1,0:T(8,128)}', space=vmem, size = 0x10000, scoped, tag = 'scratch operand']
  #allocation3 [shape = 'f32[128,128]{1,0:T(8,128)}', space=vmem, size = 0x10000, scoped, tag = 'scratch operand']
  #allocation4 [shape = 'f32[128,128]{1,0:T(8,128)}', space=vmem, size = 0x10000, scoped, tag = 'scratch operand']
  #allocation5 [shape = 's32[1]{0}', space=sflag, size = 0x4, scoped, tag = 'scratch operand']
  #allocation13 [shape = 's32[]', space=sflag, size = 0x4, offset = 0, fixed_abs, tag = 'sflag constant byte address 0x0 - dummy sync flag']
  #allocation14 [shape = 's32[]', space=sflag, size = 0x4, offset = 0, fixed_abs, tag = 'sflag constant byte address 0x0 - dummy sync flag']
  #allocation15 [shape = 'u32[]', space=smem, size = 0x4, offset = 0x44, fixed_abs, tag = 'smem constant byte address 0x44 - assertion arg 0']
  #allocation16 [shape = 'u32[]', space=smem, size = 0x4, offset = 0x48, fixed_abs, tag = 'smem constant byte address 0x48 - assertion arg 1']
  %s0 = inlined_call_operand.hbm [shape: f32[128,128], index: 0, kind: input, shape index: {}]
  %s1 = inlined_call_operand.hbm [shape: f32[128,128], index: 1, kind: input, shape index: {}]
  %s2 = inlined_call_operand.hbm [shape: f32[128,128], index: 2, kind: input, shape index: {}]
  %s3 = inlined_call_operand.vmem [shape: f32[1,128], index: 3, kind: input, shape index: {}]
  %s4 = inlined_call_operand.hbm [shape: f32[128,128], index: 4, kind: input, shape index: {}]
  %s5 = inlined_call_operand.vmem [shape: f32[1,128], index: 5, kind: input, shape index: {}]
  %s6 = inlined_call_operand.hbm [shape: f32[128,128], index: 6, kind: output, shape index: {}]
  %s7 = sld [smem:[#allocation0]]
  $region46: #{tpu_custom_call.1} parent=0
    _
  %s9 = ssub.s32 1, %s7
  %s10 = scalar_select 0, %s9, %s7
  $region1: #{tpu_custom_call.1} parent=0
    #allocation6 [shape = 'u8[65536]{0}', space=vmem, size = 0x10000, scoped, tag = 'input window, operand 1, single buffered']
    #allocation7 [shape = 's32[1]{0}', space=sflag, size = 0x4, scoped, tag = 'scoped memory for tpu_custom_call.1']
    #allocation8 [shape = 's32[1]{0}', space=sflag, size = 0x4, scoped, tag = 'scoped memory for tpu_custom_call.1']
    #allocation9 [shape = 'u8[65536]{0}', space=vmem, size = 0x10000, scoped, tag = 'input window, operand 2, single buffered']
    #allocation10 [shape = 's32[1]{0}', space=sflag, size = 0x4, scoped, tag = 'scoped memory for tpu_custom_call.1']
    #allocation11 [shape = 'u8[65536]{0}', space=vmem, size = 0x10000, scoped, tag = 'input window, operand 4, single buffered']
    #allocation12 [shape = 'u8[65536]{0}', space=vmem, size = 0x10000, scoped, tag = 'output window, operand 0, single buffered']
    %11 = vsyncpa [#allocation7], 0
    %12 = vsyncpa [#allocation10], 0
    %13 = vsyncpa [#allocation8], 0
    // Predicated region
    $region2: #{tpu_custom_call.1} parent=1 // pred_check
      _
    $region3: #{tpu_custom_call.1} parent=1 // pred_check_branch
      %15 = sbr.rel (0) target = $region5
    $region4: #{tpu_custom_call.1} parent=1 // pred_region
      %s17 = ssub.s32 2048, 2048
      %18 = vsyncadd [#allocation7], %s17
      %s19 = sshll.u32 [#allocation6], 4
      %s20 = int_to_ptr.vmem [resolvable:$true] %s19
      %25 = dma.hbm_to_vmem [thread:$0]  %s1, 2048, %s20, [#allocation7], 128, 128, 8
    $region5: #{tpu_custom_call.1} parent=1 // pred_fallthru
      _
    // Predicated region
    $region6: #{tpu_custom_call.1} parent=1 // pred_check
      _
    $region7: #{tpu_custom_call.1} parent=1 // pred_check_branch
      %27 = sbr.rel (0) target = $region9
    $region8: #{tpu_custom_call.1} parent=1 // pred_region
      %s29 = ssub.s32 2048, 2048
      %30 = vsyncadd [#allocation10], %s29
      %s31 = sshll.u32 [#allocation9], 4
      %s32 = int_to_ptr.vmem [resolvable:$true] %s31
      %37 = dma.hbm_to_vmem [thread:$0]  %s2, 2048, %s32, [#allocation10], 128, 128, 8
    $region9: #{tpu_custom_call.1} parent=1 // pred_fallthru
      _
    // Predicated region
    $region10: #{tpu_custom_call.1} parent=1 // pred_check
      _
    $region11: #{tpu_custom_call.1} parent=1 // pred_check_branch
      %39 = sbr.rel (0) target = $region13
    $region12: #{tpu_custom_call.1} parent=1 // pred_region
      _
    $region13: #{tpu_custom_call.1} parent=1 // pred_fallthru
      _
    // Predicated region
    $region14: #{tpu_custom_call.1} parent=1 // pred_check
      _
    $region15: #{tpu_custom_call.1} parent=1 // pred_check_branch
      %41 = sbr.rel (0) target = $region17
    $region16: #{tpu_custom_call.1} parent=1 // pred_region
      %s43 = ssub.s32 2048, 2048
      %44 = vsyncadd [#allocation10], %s43
      %s45 = sshll.u32 [#allocation11], 4
      %s46 = int_to_ptr.vmem [resolvable:$true] %s45
      %51 = dma.hbm_to_vmem [thread:$0]  %s4, 2048, %s46, [#allocation10], 128, 128, 8
    $region17: #{tpu_custom_call.1} parent=1 // pred_fallthru
      _
    // Predicated region
    $region18: #{tpu_custom_call.1} parent=1 // pred_check
      _
    $region19: #{tpu_custom_call.1} parent=1 // pred_check_branch
      %53 = sbr.rel (0) target = $region21
    $region20: #{tpu_custom_call.1} parent=1 // pred_region
      _
    $region21: #{tpu_custom_call.1} parent=1 // pred_fallthru
      _
    // Predicated region
    $region22: #{tpu_custom_call.1} parent=1 // pred_check
      _
    $region23: #{tpu_custom_call.1} parent=1 // pred_check_branch
      %55 = sbr.rel (0) target = $region25
    $region24: #{tpu_custom_call.1} parent=1 // pred_region
      %56 = dma.done [#allocation7], 2048
    $region25: #{tpu_custom_call.1} parent=1 // pred_fallthru
      _
    // Predicated region
    $region26: #{tpu_custom_call.1} parent=1 // pred_check
      _
    $region27: #{tpu_custom_call.1} parent=1 // pred_check_branch
      %58 = sbr.rel (0) target = $region29
    $region28: #{tpu_custom_call.1} parent=1 // pred_region
      %59 = dma.done [#allocation10], 2048
    $region29: #{tpu_custom_call.1} parent=1 // pred_fallthru
      _
    // Predicated region
    $region30: #{tpu_custom_call.1} parent=1 // pred_check
      _
    $region31: #{tpu_custom_call.1} parent=1 // pred_check_branch
      %61 = sbr.rel (0) target = $region33
    $region32: #{tpu_custom_call.1} parent=1 // pred_region
      %62 = dma.done [#allocation10], 2048
    $region33: #{tpu_custom_call.1} parent=1 // pred_fallthru
      _
    %v63 = vld [vmem:[#allocation9] sm:$0xff]
    %v64 = vld [vmem:[#allocation9 + $0x8] sm:$0xff]
    %v65 = vld [vmem:[#allocation9 + $0x10] sm:$0xff]
    %v66 = vld [vmem:[#allocation9 + $0x18] sm:$0xff]
    %v67 = vld [vmem:[#allocation9 + $0x20] sm:$0xff]
    %v68 = vld [vmem:[#allocation9 + $0x28] sm:$0xff]
    %v69 = vld [vmem:[#allocation9 + $0x30] sm:$0xff]
    %v70 = vld [vmem:[#allocation9 + $0x38] sm:$0xff]
    %v71 = vld [vmem:[#allocation9 + $0x40] sm:$0xff]
    %v72 = vld [vmem:[#allocation9 + $0x48] sm:$0xff]
    %v73 = vld [vmem:[#allocation9 + $0x50] sm:$0xff]
    %v74 = vld [vmem:[#allocation9 + $0x58] sm:$0xff]
    %v75 = vld [vmem:[#allocation9 + $0x60] sm:$0xff]
    %v76 = vld [vmem:[#allocation9 + $0x68] sm:$0xff]
    %v77 = vld [vmem:[#allocation9 + $0x70] sm:$0xff]
    %v78 = vld [vmem:[#allocation9 + $0x78] sm:$0xff]
    // Predicated region
    $region34: #{tpu_custom_call.1} parent=1 // pred_check
      _
    $region35: #{tpu_custom_call.1} parent=1 // pred_check_branch
      %80 = sbr.rel target = $region37
    $region36: #{tpu_custom_call.1} parent=1 // pred_region
      %81 = sst [smem:[#allocation15]] [#allocation14]
      %82 = sst [smem:[#allocation16]] [#allocation13]
    $region37: #{tpu_custom_call.1} parent=1 // pred_fallthru
      _
    %84 = shalt.err (0)
    %s86 = sshll.u32 [#allocation2], 4
    %s87 = int_to_ptr.vmem [resolvable:$true] %s86
    %89 = dma.hbm_to_vmem [thread:$0]  %s0, 2048, %s87, [#allocation5]
    %s90 = smul.u32 128, 1
    %s91 = sshll.u32 %s90, 4
    %92 = dma.done [#allocation5], %s91
    %v93 = vld [vmem:[#allocation6] sm:$0xff]
    %v94 = vld [vmem:[#allocation6 + $0x8] sm:$0xff]
    %v95 = vld [vmem:[#allocation6 + $0x10] sm:$0xff]
    %v96 = vld [vmem:[#allocation6 + $0x18] sm:$0xff]
    %v97 = vld [vmem:[#allocation6 + $0x20] sm:$0xff]
    %v98 = vld [vmem:[#allocation6 + $0x28] sm:$0xff]
    %v99 = vld [vmem:[#allocation6 + $0x30] sm:$0xff]
    %v100 = vld [vmem:[#allocation6 + $0x38] sm:$0xff]
    %v101 = vld [vmem:[#allocation6 + $0x40] sm:$0xff]
    %v102 = vld [vmem:[#allocation6 + $0x48] sm:$0xff]
    %v103 = vld [vmem:[#allocation6 + $0x50] sm:$0xff]
    %v104 = vld [vmem:[#allocation6 + $0x58] sm:$0xff]
    %v105 = vld [vmem:[#allocation6 + $0x60] sm:$0xff]
    %v106 = vld [vmem:[#allocation6 + $0x68] sm:$0xff]
    %v107 = vld [vmem:[#allocation6 + $0x70] sm:$0xff]
    %v108 = vld [vmem:[#allocation6 + $0x78] sm:$0xff]
    %109 = vst [vmem:[#allocation3] sm:$0xff] %v93
    %110 = vst [vmem:[#allocation3 + $0x8] sm:$0xff] %v94
    %111 = vst [vmem:[#allocation3 + $0x10] sm:$0xff] %v95
    %112 = vst [vmem:[#allocation3 + $0x18] sm:$0xff] %v96
    %113 = vst [vmem:[#allocation3 + $0x20] sm:$0xff] %v97
    %114 = vst [vmem:[#allocation3 + $0x28] sm:$0xff] %v98
    %115 = vst [vmem:[#allocation3 + $0x30] sm:$0xff] %v99
    %116 = vst [vmem:[#allocation3 + $0x38] sm:$0xff] %v100
    %117 = vst [vmem:[#allocation3 + $0x40] sm:$0xff] %v101
    %118 = vst [vmem:[#allocation3 + $0x48] sm:$0xff] %v102
    %119 = vst [vmem:[#allocation3 + $0x50] sm:$0xff] %v103
    %120 = vst [vmem:[#allocation3 + $0x58] sm:$0xff] %v104
    %121 = vst [vmem:[#allocation3 + $0x60] sm:$0xff] %v105
    %122 = vst [vmem:[#allocation3 + $0x68] sm:$0xff] %v106
    %123 = vst [vmem:[#allocation3 + $0x70] sm:$0xff] %v107
    %124 = vst [vmem:[#allocation3 + $0x78] sm:$0xff] %v108
    %v125 = vld [vmem:[#allocation2] sm:$0xff]
    %v126 = vld [vmem:[#allocation2 + $0x8] sm:$0xff]
    %v127 = vld [vmem:[#allocation2 + $0x10] sm:$0xff]
    %v128 = vld [vmem:[#allocation2 + $0x18] sm:$0xff]
    %v129 = vld [vmem:[#allocation2 + $0x20] sm:$0xff]
    %v130 = vld [vmem:[#allocation2 + $0x28] sm:$0xff]
    %v131 = vld [vmem:[#allocation2 + $0x30] sm:$0xff]
    %v132 = vld [vmem:[#allocation2 + $0x38] sm:$0xff]
    %v133 = vld [vmem:[#allocation2 + $0x40] sm:$0xff]
    %v134 = vld [vmem:[#allocation2 + $0x48] sm:$0xff]
    %v135 = vld [vmem:[#allocation2 + $0x50] sm:$0xff]
    %v136 = vld [vmem:[#allocation2 + $0x58] sm:$0xff]
    %v137 = vld [vmem:[#allocation2 + $0x60] sm:$0xff]
    %v138 = vld [vmem:[#allocation2 + $0x68] sm:$0xff]
    %v139 = vld [vmem:[#allocation2 + $0x70] sm:$0xff]
    %v140 = vld [vmem:[#allocation2 + $0x78] sm:$0xff]
    %v141 = vld [vmem:[#allocation3] sm:$0xff]
    %v142 = vld [vmem:[#allocation3 + $0x8] sm:$0xff]
    %v143 = vld [vmem:[#allocation3 + $0x10] sm:$0xff]
    %v144 = vld [vmem:[#allocation3 + $0x18] sm:$0xff]
    %v145 = vld [vmem:[#allocation3 + $0x20] sm:$0xff]
    %v146 = vld [vmem:[#allocation3 + $0x28] sm:$0xff]
    %v147 = vld [vmem:[#allocation3 + $0x30] sm:$0xff]
    %v148 = vld [vmem:[#allocation3 + $0x38] sm:$0xff]
    %v149 = vld [vmem:[#allocation3 + $0x40] sm:$0xff]
    %v150 = vld [vmem:[#allocation3 + $0x48] sm:$0xff]
    %v151 = vld [vmem:[#allocation3 + $0x50] sm:$0xff]
    %v152 = vld [vmem:[#allocation3 + $0x58] sm:$0xff]
    %v153 = vld [vmem:[#allocation3 + $0x60] sm:$0xff]
    %v154 = vld [vmem:[#allocation3 + $0x68] sm:$0xff]
    %v155 = vld [vmem:[#allocation3 + $0x70] sm:$0xff]
    %v156 = vld [vmem:[#allocation3 + $0x78] sm:$0xff]
    %157 = vmatprep.subr.mxu0 0.0
    %158 = vmatpush1.msra.mxu0 %v156
    %159 = vmatprep.subr.mxu0 0.0
    %160 = vmatpush1.msra.mxu0 %v155
    %161 = vmatprep.subr.mxu0 0.0
    %162 = vmatpush1.msra.mxu0 %v154
    %163 = vmatprep.subr.mxu0 0.0
    %164 = vmatpush1.msra.mxu0 %v153
    %165 = vmatprep.subr.mxu0 0.0
    %166 = vmatpush1.msra.mxu0 %v152
    %167 = vmatprep.subr.mxu0 0.0
    %168 = vmatpush1.msra.mxu0 %v151
    %169 = vmatprep.subr.mxu0 0.0
    %170 = vmatpush1.msra.mxu0 %v150
    %171 = vmatprep.subr.mxu0 0.0
    %172 = vmatpush1.msra.mxu0 %v149
    %173 = vmatprep.subr.mxu0 0.0
    %174 = vmatpush1.msra.mxu0 %v148
    %175 = vmatprep.subr.mxu0 0.0
    %176 = vmatpush1.msra.mxu0 %v147
    %177 = vmatprep.subr.mxu0 0.0
    %178 = vmatpush1.msra.mxu0 %v146
    %179 = vmatprep.subr.mxu0 0.0
    %180 = vmatpush1.msra.mxu0 %v145
    %181 = vmatprep.subr.mxu0 0.0
    %182 = vmatpush1.msra.mxu0 %v144
    %183 = vmatprep.subr.mxu0 0.0
    %184 = vmatpush1.msra.mxu0 %v143
    %185 = vmatprep.subr.mxu0 0.0
    %186 = vmatpush1.msra.mxu0 %v142
    %187 = vmatprep.subr.mxu0 0.0
    %188 = vmatpush1.msra.mxu0 %v141
    %189 = vmatprep.subr.mxu0 0.0
    %190 = vmatpush2.msra.mxu0 0.0
    %191 = vmatprep.subr.mxu0 0.0
    %192 = vmatpush2.msra.mxu0 0.0
    %193 = vmatprep.subr.mxu0 0.0
    %194 = vmatpush2.msra.mxu0 0.0
    %195 = vmatprep.subr.mxu0 0.0
    %196 = vmatpush2.msra.mxu0 0.0
    %197 = vmatprep.subr.mxu0 0.0
    %198 = vmatpush2.msra.mxu0 0.0
    %199 = vmatprep.subr.mxu0 0.0
    %200 = vmatpush2.msra.mxu0 0.0
    %201 = vmatprep.subr.mxu0 0.0
    %202 = vmatpush2.msra.mxu0 0.0
    %203 = vmatprep.subr.mxu0 0.0
    %204 = vmatpush2.msra.mxu0 0.0
    %205 = vmatprep.subr.mxu0 0.0
    %206 = vmatpush2.msra.mxu0 0.0
    %207 = vmatprep.subr.mxu0 0.0
    %208 = vmatpush2.msra.mxu0 0.0
    %209 = vmatprep.subr.mxu0 0.0
    %210 = vmatpush2.msra.mxu0 0.0
    %211 = vmatprep.subr.mxu0 0.0
    %212 = vmatpush2.msra.mxu0 0.0
    %213 = vmatprep.subr.mxu0 0.0
    %214 = vmatpush2.msra.mxu0 0.0
    %215 = vmatprep.subr.mxu0 0.0
    %216 = vmatpush2.msra.mxu0 0.0
    %217 = vmatprep.subr.mxu0 0.0
    %218 = vmatpush2.msra.mxu0 0.0
    %219 = vmatprep.subr.mxu0 0.0
    %220 = vmatpush2.msra.mxu0 0.0
    %221 = vmatprep.mubr.f32.mxu0 0.0
    %222 = vmatmul.mubr.f32.gmra.mxu0 %v125
    %v223 = vpop.f32.mrf.mxu0
    %v224 = vadd.f32 0.0, %v223
    %v225 = vpop.f32.mrf.mxu0
    %226 = vmatprep.mubr.f32.mxu0 0.0
    %227 = vmatmul.mubr.f32.gmra.mxu0 %v126
    %v228 = vpop.f32.mrf.mxu0
    %v229 = vadd.f32 0.0, %v228
    %v230 = vpop.f32.mrf.mxu0
    %231 = vmatprep.mubr.f32.mxu0 0.0
    %232 = vmatmul.mubr.f32.gmra.mxu0 %v127
    %v233 = vpop.f32.mrf.mxu0
    %v234 = vadd.f32 0.0, %v233
    %v235 = vpop.f32.mrf.mxu0
    %236 = vmatprep.mubr.f32.mxu0 0.0
    %237 = vmatmul.mubr.f32.gmra.mxu0 %v128
    %v238 = vpop.f32.mrf.mxu0
    %v239 = vadd.f32 0.0, %v238
    %v240 = vpop.f32.mrf.mxu0
    %241 = vmatprep.mubr.f32.mxu0 0.0
    %242 = vmatmul.mubr.f32.gmra.mxu0 %v129
    %v243 = vpop.f32.mrf.mxu0
    %v244 = vadd.f32 0.0, %v243
    %v245 = vpop.f32.mrf.mxu0
    %246 = vmatprep.mubr.f32.mxu0 0.0
    %247 = vmatmul.mubr.f32.gmra.mxu0 %v130
    %v248 = vpop.f32.mrf.mxu0
    %v249 = vadd.f32 0.0, %v248
    %v250 = vpop.f32.mrf.mxu0
    %251 = vmatprep.mubr.f32.mxu0 0.0
    %252 = vmatmul.mubr.f32.gmra.mxu0 %v131
    %v253 = vpop.f32.mrf.mxu0
    %v254 = vadd.f32 0.0, %v253
    %v255 = vpop.f32.mrf.mxu0
    %256 = vmatprep.mubr.f32.mxu0 0.0
    %257 = vmatmul.mubr.f32.gmra.mxu0 %v132
    %v258 = vpop.f32.mrf.mxu0
    %v259 = vadd.f32 0.0, %v258
    %v260 = vpop.f32.mrf.mxu0
    %261 = vmatprep.mubr.f32.mxu0 0.0
    %262 = vmatmul.mubr.f32.gmra.mxu0 %v133
    %v263 = vpop.f32.mrf.mxu0
    %v264 = vadd.f32 0.0, %v263
    %v265 = vpop.f32.mrf.mxu0
    %266 = vmatprep.mubr.f32.mxu0 0.0
    %267 = vmatmul.mubr.f32.gmra.mxu0 %v134
    %v268 = vpop.f32.mrf.mxu0
    %v269 = vadd.f32 0.0, %v268
    %v270 = vpop.f32.mrf.mxu0
    %271 = vmatprep.mubr.f32.mxu0 0.0
    %272 = vmatmul.mubr.f32.gmra.mxu0 %v135
    %v273 = vpop.f32.mrf.mxu0
    %v274 = vadd.f32 0.0, %v273
    %v275 = vpop.f32.mrf.mxu0
    %276 = vmatprep.mubr.f32.mxu0 0.0
    %277 = vmatmul.mubr.f32.gmra.mxu0 %v136
    %v278 = vpop.f32.mrf.mxu0
    %v279 = vadd.f32 0.0, %v278
    %v280 = vpop.f32.mrf.mxu0
    %281 = vmatprep.mubr.f32.mxu0 0.0
    %282 = vmatmul.mubr.f32.gmra.mxu0 %v137
    %v283 = vpop.f32.mrf.mxu0
    %v284 = vadd.f32 0.0, %v283
    %v285 = vpop.f32.mrf.mxu0
    %286 = vmatprep.mubr.f32.mxu0 0.0
    %287 = vmatmul.mubr.f32.gmra.mxu0 %v138
    %v288 = vpop.f32.mrf.mxu0
    %v289 = vadd.f32 0.0, %v288
    %v290 = vpop.f32.mrf.mxu0
    %291 = vmatprep.mubr.f32.mxu0 0.0
    %292 = vmatmul.mubr.f32.gmra.mxu0 %v139
    %v293 = vpop.f32.mrf.mxu0
    %v294 = vadd.f32 0.0, %v293
    %v295 = vpop.f32.mrf.mxu0
    %296 = vmatprep.mubr.f32.mxu0 0.0
    %297 = vmatmul.mubr.f32.gmra.mxu0 %v140
    %v298 = vpop.f32.mrf.mxu0
    %v299 = vadd.f32 0.0, %v298
    %v300 = vpop.f32.mrf.mxu0
    %301 = vdwg.mxu0
    %302 = vst [vmem:[#allocation4] sm:$0xff] %v224
    %303 = vst [vmem:[#allocation4 + $0x8] sm:$0xff] %v229
    %304 = vst [vmem:[#allocation4 + $0x10] sm:$0xff] %v234
    %305 = vst [vmem:[#allocation4 + $0x18] sm:$0xff] %v239
    %306 = vst [vmem:[#allocation4 + $0x20] sm:$0xff] %v244
    %307 = vst [vmem:[#allocation4 + $0x28] sm:$0xff] %v249
    %308 = vst [vmem:[#allocation4 + $0x30] sm:$0xff] %v254
    %309 = vst [vmem:[#allocation4 + $0x38] sm:$0xff] %v259
    %310 = vst [vmem:[#allocation4 + $0x40] sm:$0xff] %v264
    %311 = vst [vmem:[#allocation4 + $0x48] sm:$0xff] %v269
    %312 = vst [vmem:[#allocation4 + $0x50] sm:$0xff] %v274
    %313 = vst [vmem:[#allocation4 + $0x58] sm:$0xff] %v279
    %314 = vst [vmem:[#allocation4 + $0x60] sm:$0xff] %v284
    %315 = vst [vmem:[#allocation4 + $0x68] sm:$0xff] %v289
    %316 = vst [vmem:[#allocation4 + $0x70] sm:$0xff] %v294
    %317 = vst [vmem:[#allocation4 + $0x78] sm:$0xff] %v299
    %v318 = vld [vmem:[#allocation2] sm:$0xff]
    %v319 = vld [vmem:[#allocation2 + $0x8] sm:$0xff]
    %v320 = vld [vmem:[#allocation2 + $0x10] sm:$0xff]
    %v321 = vld [vmem:[#allocation2 + $0x18] sm:$0xff]
    %v322 = vld [vmem:[#allocation2 + $0x20] sm:$0xff]
    %v323 = vld [vmem:[#allocation2 + $0x28] sm:$0xff]
    %v324 = vld [vmem:[#allocation2 + $0x30] sm:$0xff]
    %v325 = vld [vmem:[#allocation2 + $0x38] sm:$0xff]
    %v326 = vld [vmem:[#allocation2 + $0x40] sm:$0xff]
    %v327 = vld [vmem:[#allocation2 + $0x48] sm:$0xff]
    %v328 = vld [vmem:[#allocation2 + $0x50] sm:$0xff]
    %v329 = vld [vmem:[#allocation2 + $0x58] sm:$0xff]
    %v330 = vld [vmem:[#allocation2 + $0x60] sm:$0xff]
    %v331 = vld [vmem:[#allocation2 + $0x68] sm:$0xff]
    %v332 = vld [vmem:[#allocation2 + $0x70] sm:$0xff]
    %v333 = vld [vmem:[#allocation2 + $0x78] sm:$0xff]
    %v334 = vld [vmem:[#allocation4] sm:$0xff]
    %v335 = vld [vmem:[#allocation4 + $0x8] sm:$0xff]
    %v336 = vld [vmem:[#allocation4 + $0x10] sm:$0xff]
    %v337 = vld [vmem:[#allocation4 + $0x18] sm:$0xff]
    %v338 = vld [vmem:[#allocation4 + $0x20] sm:$0xff]
    %v339 = vld [vmem:[#allocation4 + $0x28] sm:$0xff]
    %v340 = vld [vmem:[#allocation4 + $0x30] sm:$0xff]
    %v341 = vld [vmem:[#allocation4 + $0x38] sm:$0xff]
    %v342 = vld [vmem:[#allocation4 + $0x40] sm:$0xff]
    %v343 = vld [vmem:[#allocation4 + $0x48] sm:$0xff]
    %v344 = vld [vmem:[#allocation4 + $0x50] sm:$0xff]
    %v345 = vld [vmem:[#allocation4 + $0x58] sm:$0xff]
    %v346 = vld [vmem:[#allocation4 + $0x60] sm:$0xff]
    %v347 = vld [vmem:[#allocation4 + $0x68] sm:$0xff]
    %v348 = vld [vmem:[#allocation4 + $0x70] sm:$0xff]
    %v349 = vld [vmem:[#allocation4 + $0x78] sm:$0xff]
    %350 = vmatprep.subr.mxu0 0.0
    %351 = vmatpush1.msra.mxu0 %v349
    %352 = vmatprep.subr.mxu0 0.0
    %353 = vmatpush1.msra.mxu0 %v348
    %354 = vmatprep.subr.mxu0 0.0
    %355 = vmatpush1.msra.mxu0 %v347
    %356 = vmatprep.subr.mxu0 0.0
    %357 = vmatpush1.msra.mxu0 %v346
    %358 = vmatprep.subr.mxu0 0.0
    %359 = vmatpush1.msra.mxu0 %v345
    %360 = vmatprep.subr.mxu0 0.0
    %361 = vmatpush1.msra.mxu0 %v344
    %362 = vmatprep.subr.mxu0 0.0
    %363 = vmatpush1.msra.mxu0 %v343
    %364 = vmatprep.subr.mxu0 0.0
    %365 = vmatpush1.msra.mxu0 %v342
    %366 = vmatprep.subr.mxu0 0.0
    %367 = vmatpush1.msra.mxu0 %v341
    %368 = vmatprep.subr.mxu0 0.0
    %369 = vmatpush1.msra.mxu0 %v340
    %370 = vmatprep.subr.mxu0 0.0
    %371 = vmatpush1.msra.mxu0 %v339
    %372 = vmatprep.subr.mxu0 0.0
    %373 = vmatpush1.msra.mxu0 %v338
    %374 = vmatprep.subr.mxu0 0.0
    %375 = vmatpush1.msra.mxu0 %v337
    %376 = vmatprep.subr.mxu0 0.0
    %377 = vmatpush1.msra.mxu0 %v336
    %378 = vmatprep.subr.mxu0 0.0
    %379 = vmatpush1.msra.mxu0 %v335
    %380 = vmatprep.subr.mxu0 0.0
    %381 = vmatpush1.msra.mxu0 %v334
    %382 = vmatprep.subr.mxu0 0.0
    %383 = vmatpush2.msra.mxu0 0.0
    %384 = vmatprep.subr.mxu0 0.0
    %385 = vmatpush2.msra.mxu0 0.0
    %386 = vmatprep.subr.mxu0 0.0
    %387 = vmatpush2.msra.mxu0 0.0
    %388 = vmatprep.subr.mxu0 0.0
    %389 = vmatpush2.msra.mxu0 0.0
    %390 = vmatprep.subr.mxu0 0.0
    %391 = vmatpush2.msra.mxu0 0.0
    %392 = vmatprep.subr.mxu0 0.0
    %393 = vmatpush2.msra.mxu0 0.0
    %394 = vmatprep.subr.mxu0 0.0
    %395 = vmatpush2.msra.mxu0 0.0
    %396 = vmatprep.subr.mxu0 0.0
    %397 = vmatpush2.msra.mxu0 0.0
    %398 = vmatprep.subr.mxu0 0.0
    %399 = vmatpush2.msra.mxu0 0.0
    %400 = vmatprep.subr.mxu0 0.0
    %401 = vmatpush2.msra.mxu0 0.0
    %402 = vmatprep.subr.mxu0 0.0
    %403 = vmatpush2.msra.mxu0 0.0
    %404 = vmatprep.subr.mxu0 0.0
    %405 = vmatpush2.msra.mxu0 0.0
    %406 = vmatprep.subr.mxu0 0.0
    %407 = vmatpush2.msra.mxu0 0.0
    %408 = vmatprep.subr.mxu0 0.0
    %409 = vmatpush2.msra.mxu0 0.0
    %410 = vmatprep.subr.mxu0 0.0
    %411 = vmatpush2.msra.mxu0 0.0
    %412 = vmatprep.subr.mxu0 0.0
    %413 = vmatpush2.msra.mxu0 0.0
    %414 = vmatprep.mubr.f32.mxu0 0.0
    %415 = vmatmul.mubr.f32.gmra.mxu0 %v318
    %v416 = vpop.f32.mrf.mxu0
    %v417 = vadd.f32 0.0, %v416
    %v418 = vpop.f32.mrf.mxu0
    %419 = vmatprep.mubr.f32.mxu0 0.0
    %420 = vmatmul.mubr.f32.gmra.mxu0 %v319
    %v421 = vpop.f32.mrf.mxu0
    %v422 = vadd.f32 0.0, %v421
    %v423 = vpop.f32.mrf.mxu0
    %424 = vmatprep.mubr.f32.mxu0 0.0
    %425 = vmatmul.mubr.f32.gmra.mxu0 %v320
    %v426 = vpop.f32.mrf.mxu0
    %v427 = vadd.f32 0.0, %v426
    %v428 = vpop.f32.mrf.mxu0
    %429 = vmatprep.mubr.f32.mxu0 0.0
    %430 = vmatmul.mubr.f32.gmra.mxu0 %v321
    %v431 = vpop.f32.mrf.mxu0
    %v432 = vadd.f32 0.0, %v431
    %v433 = vpop.f32.mrf.mxu0
    %434 = vmatprep.mubr.f32.mxu0 0.0
    %435 = vmatmul.mubr.f32.gmra.mxu0 %v322
    %v436 = vpop.f32.mrf.mxu0
    %v437 = vadd.f32 0.0, %v436
    %v438 = vpop.f32.mrf.mxu0
    %439 = vmatprep.mubr.f32.mxu0 0.0
    %440 = vmatmul.mubr.f32.gmra.mxu0 %v323
    %v441 = vpop.f32.mrf.mxu0
    %v442 = vadd.f32 0.0, %v441
    %v443 = vpop.f32.mrf.mxu0
    %444 = vmatprep.mubr.f32.mxu0 0.0
    %445 = vmatmul.mubr.f32.gmra.mxu0 %v324
    %v446 = vpop.f32.mrf.mxu0
    %v447 = vadd.f32 0.0, %v446
    %v448 = vpop.f32.mrf.mxu0
    %449 = vmatprep.mubr.f32.mxu0 0.0
    %450 = vmatmul.mubr.f32.gmra.mxu0 %v325
    %v451 = vpop.f32.mrf.mxu0
    %v452 = vadd.f32 0.0, %v451
    %v453 = vpop.f32.mrf.mxu0
    %454 = vmatprep.mubr.f32.mxu0 0.0
    %455 = vmatmul.mubr.f32.gmra.mxu0 %v326
    %v456 = vpop.f32.mrf.mxu0
    %v457 = vadd.f32 0.0, %v456
    %v458 = vpop.f32.mrf.mxu0
    %459 = vmatprep.mubr.f32.mxu0 0.0
    %460 = vmatmul.mubr.f32.gmra.mxu0 %v327
    %v461 = vpop.f32.mrf.mxu0
    %v462 = vadd.f32 0.0, %v461
    %v463 = vpop.f32.mrf.mxu0
    %464 = vmatprep.mubr.f32.mxu0 0.0
    %465 = vmatmul.mubr.f32.gmra.mxu0 %v328
    %v466 = vpop.f32.mrf.mxu0
    %v467 = vadd.f32 0.0, %v466
    %v468 = vpop.f32.mrf.mxu0
    %469 = vmatprep.mubr.f32.mxu0 0.0
    %470 = vmatmul.mubr.f32.gmra.mxu0 %v329
    %v471 = vpop.f32.mrf.mxu0
    %v472 = vadd.f32 0.0, %v471
    %v473 = vpop.f32.mrf.mxu0
    %474 = vmatprep.mubr.f32.mxu0 0.0
    %475 = vmatmul.mubr.f32.gmra.mxu0 %v330
    %v476 = vpop.f32.mrf.mxu0
    %v477 = vadd.f32 0.0, %v476
    %v478 = vpop.f32.mrf.mxu0
    %479 = vmatprep.mubr.f32.mxu0 0.0
    %480 = vmatmul.mubr.f32.gmra.mxu0 %v331
    %v481 = vpop.f32.mrf.mxu0
    %v482 = vadd.f32 0.0, %v481
    %v483 = vpop.f32.mrf.mxu0
    %484 = vmatprep.mubr.f32.mxu0 0.0
    %485 = vmatmul.mubr.f32.gmra.mxu0 %v332
    %v486 = vpop.f32.mrf.mxu0
    %v487 = vadd.f32 0.0, %v486
    %v488 = vpop.f32.mrf.mxu0
    %489 = vmatprep.mubr.f32.mxu0 0.0
    %490 = vmatmul.mubr.f32.gmra.mxu0 %v333
    %v491 = vpop.f32.mrf.mxu0
    %v492 = vadd.f32 0.0, %v491
    %v493 = vpop.f32.mrf.mxu0
    %494 = vdwg.mxu0
    %495 = vst [vmem:[#allocation3] sm:$0xff] %v417
    %496 = vst [vmem:[#allocation3 + $0x8] sm:$0xff] %v422
    %497 = vst [vmem:[#allocation3 + $0x10] sm:$0xff] %v427
    %498 = vst [vmem:[#allocation3 + $0x18] sm:$0xff] %v432
    %499 = vst [vmem:[#allocation3 + $0x20] sm:$0xff] %v437
    %500 = vst [vmem:[#allocation3 + $0x28] sm:$0xff] %v442
    %501 = vst [vmem:[#allocation3 + $0x30] sm:$0xff] %v447
    %502 = vst [vmem:[#allocation3 + $0x38] sm:$0xff] %v452
    %503 = vst [vmem:[#allocation3 + $0x40] sm:$0xff] %v457
    %504 = vst [vmem:[#allocation3 + $0x48] sm:$0xff] %v462
    %505 = vst [vmem:[#allocation3 + $0x50] sm:$0xff] %v467
    %506 = vst [vmem:[#allocation3 + $0x58] sm:$0xff] %v472
    %507 = vst [vmem:[#allocation3 + $0x60] sm:$0xff] %v477
    %508 = vst [vmem:[#allocation3 + $0x68] sm:$0xff] %v482
    %509 = vst [vmem:[#allocation3 + $0x70] sm:$0xff] %v487
    %510 = vst [vmem:[#allocation3 + $0x78] sm:$0xff] %v492
    %v511 = vld [vmem:[#allocation3] sm:$0xff]
    %v512 = vld [vmem:[#allocation3 + $0x8] sm:$0xff]
    %v513 = vld [vmem:[#allocation3 + $0x10] sm:$0xff]
    %v514 = vld [vmem:[#allocation3 + $0x18] sm:$0xff]
    %v515 = vld [vmem:[#allocation3 + $0x20] sm:$0xff]
    %v516 = vld [vmem:[#allocation3 + $0x28] sm:$0xff]
    %v517 = vld [vmem:[#allocation3 + $0x30] sm:$0xff]
    %v518 = vld [vmem:[#allocation3 + $0x38] sm:$0xff]
    %v519 = vld [vmem:[#allocation3 + $0x40] sm:$0xff]
    %v520 = vld [vmem:[#allocation3 + $0x48] sm:$0xff]
    %v521 = vld [vmem:[#allocation3 + $0x50] sm:$0xff]
    %v522 = vld [vmem:[#allocation3 + $0x58] sm:$0xff]
    %v523 = vld [vmem:[#allocation3 + $0x60] sm:$0xff]
    %v524 = vld [vmem:[#allocation3 + $0x68] sm:$0xff]
    %v525 = vld [vmem:[#allocation3 + $0x70] sm:$0xff]
    %v526 = vld [vmem:[#allocation3 + $0x78] sm:$0xff]
    %v527 = vld [vmem:[%s3] sm:$0x1]
    %v528 = vld [vmem:[#allocation11] sm:$0xff]
    %v529 = vld [vmem:[#allocation11 + $0x8] sm:$0xff]
    %v530 = vld [vmem:[#allocation11 + $0x10] sm:$0xff]
    %v531 = vld [vmem:[#allocation11 + $0x18] sm:$0xff]
    %v532 = vld [vmem:[#allocation11 + $0x20] sm:$0xff]
    %v533 = vld [vmem:[#allocation11 + $0x28] sm:$0xff]
    %v534 = vld [vmem:[#allocation11 + $0x30] sm:$0xff]
    %v535 = vld [vmem:[#allocation11 + $0x38] sm:$0xff]
    %v536 = vld [vmem:[#allocation11 + $0x40] sm:$0xff]
    %v537 = vld [vmem:[#allocation11 + $0x48] sm:$0xff]
    %v538 = vld [vmem:[#allocation11 + $0x50] sm:$0xff]
    %v539 = vld [vmem:[#allocation11 + $0x58] sm:$0xff]
    %v540 = vld [vmem:[#allocation11 + $0x60] sm:$0xff]
    %v541 = vld [vmem:[#allocation11 + $0x68] sm:$0xff]
    %v542 = vld [vmem:[#allocation11 + $0x70] sm:$0xff]
    %v543 = vld [vmem:[#allocation11 + $0x78] sm:$0xff]
    %v544 = vld [vmem:[%s5] sm:$0x1]
    %v546 = vlaneseq
    %v547 = vshrl.u32 %v546, 7
    %v548 = vsub.s32 0, %v547
    %v549 = vrot.slane %v527, %v548
    %551 = vmatprep.subr.mxu0 0.0
    %552 = vmatpush1.msra.mxu0 %v78
    %553 = vmatprep.subr.mxu0 0.0
    %554 = vmatpush1.msra.mxu0 %v77
    %555 = vmatprep.subr.mxu0 0.0
    %556 = vmatpush1.msra.mxu0 %v76
    %557 = vmatprep.subr.mxu0 0.0
    %558 = vmatpush1.msra.mxu0 %v75
    %559 = vmatprep.subr.mxu0 0.0
    %560 = vmatpush1.msra.mxu0 %v74
    %561 = vmatprep.subr.mxu0 0.0
    %562 = vmatpush1.msra.mxu0 %v73
    %563 = vmatprep.subr.mxu0 0.0
    %564 = vmatpush1.msra.mxu0 %v72
    %565 = vmatprep.subr.mxu0 0.0
    %566 = vmatpush1.msra.mxu0 %v71
    %567 = vmatprep.subr.mxu0 0.0
    %568 = vmatpush1.msra.mxu0 %v70
    %569 = vmatprep.subr.mxu0 0.0
    %570 = vmatpush1.msra.mxu0 %v69
    %571 = vmatprep.subr.mxu0 0.0
    %572 = vmatpush1.msra.mxu0 %v68
    %573 = vmatprep.subr.mxu0 0.0
    %574 = vmatpush1.msra.mxu0 %v67
    %575 = vmatprep.subr.mxu0 0.0
    %576 = vmatpush1.msra.mxu0 %v66
    %577 = vmatprep.subr.mxu0 0.0
    %578 = vmatpush1.msra.mxu0 %v65
    %579 = vmatprep.subr.mxu0 0.0
    %580 = vmatpush1.msra.mxu0 %v64
    %581 = vmatprep.subr.mxu0 0.0
    %582 = vmatpush1.msra.mxu0 %v63
    %583 = vmatprep.subr.mxu0 0.0
    %584 = vmatpush2.msra.mxu0 0.0
    %585 = vmatprep.subr.mxu0 0.0
    %586 = vmatpush2.msra.mxu0 0.0
    %587 = vmatprep.subr.mxu0 0.0
    %588 = vmatpush2.msra.mxu0 0.0
    %589 = vmatprep.subr.mxu0 0.0
    %590 = vmatpush2.msra.mxu0 0.0
    %591 = vmatprep.subr.mxu0 0.0
    %592 = vmatpush2.msra.mxu0 0.0
    %593 = vmatprep.subr.mxu0 0.0
    %594 = vmatpush2.msra.mxu0 0.0
    %595 = vmatprep.subr.mxu0 0.0
    %596 = vmatpush2.msra.mxu0 0.0
    %597 = vmatprep.subr.mxu0 0.0
    %598 = vmatpush2.msra.mxu0 0.0
    %599 = vmatprep.subr.mxu0 0.0
    %600 = vmatpush2.msra.mxu0 0.0
    %601 = vmatprep.subr.mxu0 0.0
    %602 = vmatpush2.msra.mxu0 0.0
    %603 = vmatprep.subr.mxu0 0.0
    %604 = vmatpush2.msra.mxu0 0.0
    %605 = vmatprep.subr.mxu0 0.0
    %606 = vmatpush2.msra.mxu0 0.0
    %607 = vmatprep.subr.mxu0 0.0
    %608 = vmatpush2.msra.mxu0 0.0
    %609 = vmatprep.subr.mxu0 0.0
    %610 = vmatpush2.msra.mxu0 0.0
    %611 = vmatprep.subr.mxu0 0.0
    %612 = vmatpush2.msra.mxu0 0.0
    %613 = vmatprep.subr.mxu0 0.0
    %614 = vmatpush2.msra.mxu0 0.0
    %615 = vmatprep.mubr.f32.mxu0 0.0
    %616 = vmatmul.mubr.f32.gmra.mxu0 %v511
    %v617 = vpop.f32.mrf.mxu0
    %v618 = vadd.f32 %v549, %v617
    %v619 = vpop.f32.mrf.mxu0
    %620 = vmatprep.mubr.f32.mxu0 0.0
    %621 = vmatmul.mubr.f32.gmra.mxu0 %v512
    %v622 = vpop.f32.mrf.mxu0
    %v623 = vadd.f32 %v549, %v622
    %v624 = vpop.f32.mrf.mxu0
    %625 = vmatprep.mubr.f32.mxu0 0.0
    %626 = vmatmul.mubr.f32.gmra.mxu0 %v513
    %v627 = vpop.f32.mrf.mxu0
    %v628 = vadd.f32 %v549, %v627
    %v629 = vpop.f32.mrf.mxu0
    %630 = vmatprep.mubr.f32.mxu0 0.0
    %631 = vmatmul.mubr.f32.gmra.mxu0 %v514
    %v632 = vpop.f32.mrf.mxu0
    %v633 = vadd.f32 %v549, %v632
    %v634 = vpop.f32.mrf.mxu0
    %635 = vmatprep.mubr.f32.mxu0 0.0
    %636 = vmatmul.mubr.f32.gmra.mxu0 %v515
    %v637 = vpop.f32.mrf.mxu0
    %v638 = vadd.f32 %v549, %v637
    %v639 = vpop.f32.mrf.mxu0
    %640 = vmatprep.mubr.f32.mxu0 0.0
    %641 = vmatmul.mubr.f32.gmra.mxu0 %v516
    %v642 = vpop.f32.mrf.mxu0
    %v643 = vadd.f32 %v549, %v642
    %v644 = vpop.f32.mrf.mxu0
    %645 = vmatprep.mubr.f32.mxu0 0.0
    %646 = vmatmul.mubr.f32.gmra.mxu0 %v517
    %v647 = vpop.f32.mrf.mxu0
    %v648 = vadd.f32 %v549, %v647
    %v649 = vpop.f32.mrf.mxu0
    %650 = vmatprep.mubr.f32.mxu0 0.0
    %651 = vmatmul.mubr.f32.gmra.mxu0 %v518
    %v652 = vpop.f32.mrf.mxu0
    %v653 = vadd.f32 %v549, %v652
    %v654 = vpop.f32.mrf.mxu0
    %655 = vmatprep.mubr.f32.mxu0 0.0
    %656 = vmatmul.mubr.f32.gmra.mxu0 %v519
    %v657 = vpop.f32.mrf.mxu0
    %v658 = vadd.f32 %v549, %v657
    %v659 = vpop.f32.mrf.mxu0
    %660 = vmatprep.mubr.f32.mxu0 0.0
    %661 = vmatmul.mubr.f32.gmra.mxu0 %v520
    %v662 = vpop.f32.mrf.mxu0
    %v663 = vadd.f32 %v549, %v662
    %v664 = vpop.f32.mrf.mxu0
    %665 = vmatprep.mubr.f32.mxu0 0.0
    %666 = vmatmul.mubr.f32.gmra.mxu0 %v521
    %v667 = vpop.f32.mrf.mxu0
    %v668 = vadd.f32 %v549, %v667
    %v669 = vpop.f32.mrf.mxu0
    %670 = vmatprep.mubr.f32.mxu0 0.0
    %671 = vmatmul.mubr.f32.gmra.mxu0 %v522
    %v672 = vpop.f32.mrf.mxu0
    %v673 = vadd.f32 %v549, %v672
    %v674 = vpop.f32.mrf.mxu0
    %675 = vmatprep.mubr.f32.mxu0 0.0
    %676 = vmatmul.mubr.f32.gmra.mxu0 %v523
    %v677 = vpop.f32.mrf.mxu0
    %v678 = vadd.f32 %v549, %v677
    %v679 = vpop.f32.mrf.mxu0
    %680 = vmatprep.mubr.f32.mxu0 0.0
    %681 = vmatmul.mubr.f32.gmra.mxu0 %v524
    %v682 = vpop.f32.mrf.mxu0
    %v683 = vadd.f32 %v549, %v682
    %v684 = vpop.f32.mrf.mxu0
    %685 = vmatprep.mubr.f32.mxu0 0.0
    %686 = vmatmul.mubr.f32.gmra.mxu0 %v525
    %v687 = vpop.f32.mrf.mxu0
    %v688 = vadd.f32 %v549, %v687
    %v689 = vpop.f32.mrf.mxu0
    %690 = vmatprep.mubr.f32.mxu0 0.0
    %691 = vmatmul.mubr.f32.gmra.mxu0 %v526
    %v692 = vpop.f32.mrf.mxu0
    %v693 = vadd.f32 %v549, %v692
    %v694 = vpop.f32.mrf.mxu0
    %695 = vdwg.mxu0
    %v696 = vmax.f32 %v618, 0.0
    %v697 = vmax.f32 %v623, 0.0
    %v698 = vmax.f32 %v628, 0.0
    %v699 = vmax.f32 %v633, 0.0
    %v700 = vmax.f32 %v638, 0.0
    %v701 = vmax.f32 %v643, 0.0
    %v702 = vmax.f32 %v648, 0.0
    %v703 = vmax.f32 %v653, 0.0
    %v704 = vmax.f32 %v658, 0.0
    %v705 = vmax.f32 %v663, 0.0
    %v706 = vmax.f32 %v668, 0.0
    %v707 = vmax.f32 %v673, 0.0
    %v708 = vmax.f32 %v678, 0.0
    %v709 = vmax.f32 %v683, 0.0
    %v710 = vmax.f32 %v688, 0.0
    %v711 = vmax.f32 %v693, 0.0
    %v713 = vlaneseq
    %v714 = vshrl.u32 %v713, 7
    %v715 = vsub.s32 0, %v714
    %v716 = vrot.slane %v544, %v715
    %718 = vmatprep.subr.mxu0 0.0
    %719 = vmatpush1.msra.mxu0 %v543
    %720 = vmatprep.subr.mxu0 0.0
    %721 = vmatpush1.msra.mxu0 %v542
    %722 = vmatprep.subr.mxu0 0.0
    %723 = vmatpush1.msra.mxu0 %v541
    %724 = vmatprep.subr.mxu0 0.0
    %725 = vmatpush1.msra.mxu0 %v540
    %726 = vmatprep.subr.mxu0 0.0
    %727 = vmatpush1.msra.mxu0 %v539
    %728 = vmatprep.subr.mxu0 0.0
    %729 = vmatpush1.msra.mxu0 %v538
    %730 = vmatprep.subr.mxu0 0.0
    %731 = vmatpush1.msra.mxu0 %v537
    %732 = vmatprep.subr.mxu0 0.0
    %733 = vmatpush1.msra.mxu0 %v536
    %734 = vmatprep.subr.mxu0 0.0
    %735 = vmatpush1.msra.mxu0 %v535
    %736 = vmatprep.subr.mxu0 0.0
    %737 = vmatpush1.msra.mxu0 %v534
    %738 = vmatprep.subr.mxu0 0.0
    %739 = vmatpush1.msra.mxu0 %v533
    %740 = vmatprep.subr.mxu0 0.0
    %741 = vmatpush1.msra.mxu0 %v532
    %742 = vmatprep.subr.mxu0 0.0
    %743 = vmatpush1.msra.mxu0 %v531
    %744 = vmatprep.subr.mxu0 0.0
    %745 = vmatpush1.msra.mxu0 %v530
    %746 = vmatprep.subr.mxu0 0.0
    %747 = vmatpush1.msra.mxu0 %v529
    %748 = vmatprep.subr.mxu0 0.0
    %749 = vmatpush1.msra.mxu0 %v528
    %750 = vmatprep.subr.mxu0 0.0
    %751 = vmatpush2.msra.mxu0 0.0
    %752 = vmatprep.subr.mxu0 0.0
    %753 = vmatpush2.msra.mxu0 0.0
    %754 = vmatprep.subr.mxu0 0.0
    %755 = vmatpush2.msra.mxu0 0.0
    %756 = vmatprep.subr.mxu0 0.0
    %757 = vmatpush2.msra.mxu0 0.0
    %758 = vmatprep.subr.mxu0 0.0
    %759 = vmatpush2.msra.mxu0 0.0
    %760 = vmatprep.subr.mxu0 0.0
    %761 = vmatpush2.msra.mxu0 0.0
    %762 = vmatprep.subr.mxu0 0.0
    %763 = vmatpush2.msra.mxu0 0.0
    %764 = vmatprep.subr.mxu0 0.0
    %765 = vmatpush2.msra.mxu0 0.0
    %766 = vmatprep.subr.mxu0 0.0
    %767 = vmatpush2.msra.mxu0 0.0
    %768 = vmatprep.subr.mxu0 0.0
    %769 = vmatpush2.msra.mxu0 0.0
    %770 = vmatprep.subr.mxu0 0.0
    %771 = vmatpush2.msra.mxu0 0.0
    %772 = vmatprep.subr.mxu0 0.0
    %773 = vmatpush2.msra.mxu0 0.0
    %774 = vmatprep.subr.mxu0 0.0
    %775 = vmatpush2.msra.mxu0 0.0
    %776 = vmatprep.subr.mxu0 0.0
    %777 = vmatpush2.msra.mxu0 0.0
    %778 = vmatprep.subr.mxu0 0.0
    %779 = vmatpush2.msra.mxu0 0.0
    %780 = vmatprep.subr.mxu0 0.0
    %781 = vmatpush2.msra.mxu0 0.0
    %782 = vmatprep.mubr.f32.mxu0 0.0
    %783 = vmatmul.mubr.f32.gmra.mxu0 %v696
    %v784 = vpop.f32.mrf.mxu0
    %v785 = vadd.f32 %v716, %v784
    %v786 = vpop.f32.mrf.mxu0
    %787 = vmatprep.mubr.f32.mxu0 0.0
    %788 = vmatmul.mubr.f32.gmra.mxu0 %v697
    %v789 = vpop.f32.mrf.mxu0
    %v790 = vadd.f32 %v716, %v789
    %v791 = vpop.f32.mrf.mxu0
    %792 = vmatprep.mubr.f32.mxu0 0.0
    %793 = vmatmul.mubr.f32.gmra.mxu0 %v698
    %v794 = vpop.f32.mrf.mxu0
    %v795 = vadd.f32 %v716, %v794
    %v796 = vpop.f32.mrf.mxu0
    %797 = vmatprep.mubr.f32.mxu0 0.0
    %798 = vmatmul.mubr.f32.gmra.mxu0 %v699
    %v799 = vpop.f32.mrf.mxu0
    %v800 = vadd.f32 %v716, %v799
    %v801 = vpop.f32.mrf.mxu0
    %802 = vmatprep.mubr.f32.mxu0 0.0
    %803 = vmatmul.mubr.f32.gmra.mxu0 %v700
    %v804 = vpop.f32.mrf.mxu0
    %v805 = vadd.f32 %v716, %v804
    %v806 = vpop.f32.mrf.mxu0
    %807 = vmatprep.mubr.f32.mxu0 0.0
    %808 = vmatmul.mubr.f32.gmra.mxu0 %v701
    %v809 = vpop.f32.mrf.mxu0
    %v810 = vadd.f32 %v716, %v809
    %v811 = vpop.f32.mrf.mxu0
    %812 = vmatprep.mubr.f32.mxu0 0.0
    %813 = vmatmul.mubr.f32.gmra.mxu0 %v702
    %v814 = vpop.f32.mrf.mxu0
    %v815 = vadd.f32 %v716, %v814
    %v816 = vpop.f32.mrf.mxu0
    %817 = vmatprep.mubr.f32.mxu0 0.0
    %818 = vmatmul.mubr.f32.gmra.mxu0 %v703
    %v819 = vpop.f32.mrf.mxu0
    %v820 = vadd.f32 %v716, %v819
    %v821 = vpop.f32.mrf.mxu0
    %822 = vmatprep.mubr.f32.mxu0 0.0
    %823 = vmatmul.mubr.f32.gmra.mxu0 %v704
    %v824 = vpop.f32.mrf.mxu0
    %v825 = vadd.f32 %v716, %v824
    %v826 = vpop.f32.mrf.mxu0
    %827 = vmatprep.mubr.f32.mxu0 0.0
    %828 = vmatmul.mubr.f32.gmra.mxu0 %v705
    %v829 = vpop.f32.mrf.mxu0
    %v830 = vadd.f32 %v716, %v829
    %v831 = vpop.f32.mrf.mxu0
    %832 = vmatprep.mubr.f32.mxu0 0.0
    %833 = vmatmul.mubr.f32.gmra.mxu0 %v706
    %v834 = vpop.f32.mrf.mxu0
    %v835 = vadd.f32 %v716, %v834
    %v836 = vpop.f32.mrf.mxu0
    %837 = vmatprep.mubr.f32.mxu0 0.0
    %838 = vmatmul.mubr.f32.gmra.mxu0 %v707
    %v839 = vpop.f32.mrf.mxu0
    %v840 = vadd.f32 %v716, %v839
    %v841 = vpop.f32.mrf.mxu0
    %842 = vmatprep.mubr.f32.mxu0 0.0
    %843 = vmatmul.mubr.f32.gmra.mxu0 %v708
    %v844 = vpop.f32.mrf.mxu0
    %v845 = vadd.f32 %v716, %v844
    %v846 = vpop.f32.mrf.mxu0
    %847 = vmatprep.mubr.f32.mxu0 0.0
    %848 = vmatmul.mubr.f32.gmra.mxu0 %v709
    %v849 = vpop.f32.mrf.mxu0
    %v850 = vadd.f32 %v716, %v849
    %v851 = vpop.f32.mrf.mxu0
    %852 = vmatprep.mubr.f32.mxu0 0.0
    %853 = vmatmul.mubr.f32.gmra.mxu0 %v710
    %v854 = vpop.f32.mrf.mxu0
    %v855 = vadd.f32 %v716, %v854
    %v856 = vpop.f32.mrf.mxu0
    %857 = vmatprep.mubr.f32.mxu0 0.0
    %858 = vmatmul.mubr.f32.gmra.mxu0 %v711
    %v859 = vpop.f32.mrf.mxu0
    %v860 = vadd.f32 %v716, %v859
    %v861 = vpop.f32.mrf.mxu0
    %862 = vdwg.mxu0
    %v863 = vlaneseq
    %v864 = vand.u32 %v863, 127
    %vm865 = vcmp.lt.s32.totalorder %v864, 4
    %v866 = vsel %vm865, %v785, -1e+30
    %v867 = vsel %vm865, %v790, -1e+30
    %v868 = vsel %vm865, %v795, -1e+30
    %v869 = vsel %vm865, %v800, -1e+30
    %v870 = vsel %vm865, %v805, -1e+30
    %v871 = vsel %vm865, %v810, -1e+30
    %v872 = vsel %vm865, %v815, -1e+30
    %v873 = vsel %vm865, %v820, -1e+30
    %v874 = vsel %vm865, %v825, -1e+30
    %v875 = vsel %vm865, %v830, -1e+30
    %v876 = vsel %vm865, %v835, -1e+30
    %v877 = vsel %vm865, %v840, -1e+30
    %v878 = vsel %vm865, %v845, -1e+30
    %v879 = vsel %vm865, %v850, -1e+30
    %v880 = vsel %vm865, %v855, -1e+30
    %v881 = vsel %vm865, %v860, -1e+30
    %882 = vmax.xlane.f32.xlu0 %v866
    %v883 = vpop.xlane.xlu0 %882
    %884 = vmax.xlane.f32.xlu0 %v867
    %v885 = vpop.xlane.xlu0 %884
    %886 = vmax.xlane.f32.xlu0 %v868
    %v887 = vpop.xlane.xlu0 %886
    %888 = vmax.xlane.f32.xlu0 %v869
    %v889 = vpop.xlane.xlu0 %888
    %890 = vmax.xlane.f32.xlu0 %v870
    %v891 = vpop.xlane.xlu0 %890
    %892 = vmax.xlane.f32.xlu0 %v871
    %v893 = vpop.xlane.xlu0 %892
    %894 = vmax.xlane.f32.xlu0 %v872
    %v895 = vpop.xlane.xlu0 %894
    %896 = vmax.xlane.f32.xlu0 %v873
    %v897 = vpop.xlane.xlu0 %896
    %898 = vmax.xlane.f32.xlu0 %v874
    %v899 = vpop.xlane.xlu0 %898
    %900 = vmax.xlane.f32.xlu0 %v875
    %v901 = vpop.xlane.xlu0 %900
    %902 = vmax.xlane.f32.xlu0 %v876
    %v903 = vpop.xlane.xlu0 %902
    %904 = vmax.xlane.f32.xlu0 %v877
    %v905 = vpop.xlane.xlu0 %904
    %906 = vmax.xlane.f32.xlu0 %v878
    %v907 = vpop.xlane.xlu0 %906
    %908 = vmax.xlane.f32.xlu0 %v879
    %v909 = vpop.xlane.xlu0 %908
    %910 = vmax.xlane.f32.xlu0 %v880
    %v911 = vpop.xlane.xlu0 %910
    %912 = vmax.xlane.f32.xlu0 %v881
    %v913 = vpop.xlane.xlu0 %912
    %v914 = vsub.f32 %v866, %v883
    %v915 = vsub.f32 %v867, %v885
    %v916 = vsub.f32 %v868, %v887
    %v917 = vsub.f32 %v869, %v889
    %v918 = vsub.f32 %v870, %v891
    %v919 = vsub.f32 %v871, %v893
    %v920 = vsub.f32 %v872, %v895
    %v921 = vsub.f32 %v873, %v897
    %v922 = vsub.f32 %v874, %v899
    %v923 = vsub.f32 %v875, %v901
    %v924 = vsub.f32 %v876, %v903
    %v925 = vsub.f32 %v877, %v905
    %v926 = vsub.f32 %v878, %v907
    %v927 = vsub.f32 %v879, %v909
    %v928 = vsub.f32 %v880, %v911
    %v929 = vsub.f32 %v881, %v913
    %v930 = vmul.f32 %v914, 1.442695
    %v931 = vpow.pop %v930
    %v932 = vmul.f32 %v915, 1.442695
    %v933 = vpow.pop %v932
    %v934 = vmul.f32 %v916, 1.442695
    %v935 = vpow.pop %v934
    %v936 = vmul.f32 %v917, 1.442695
    %v937 = vpow.pop %v936
    %v938 = vmul.f32 %v918, 1.442695
    %v939 = vpow.pop %v938
    %v940 = vmul.f32 %v919, 1.442695
    %v941 = vpow.pop %v940
    %v942 = vmul.f32 %v920, 1.442695
    %v943 = vpow.pop %v942
    %v944 = vmul.f32 %v921, 1.442695
    %v945 = vpow.pop %v944
    %v946 = vmul.f32 %v922, 1.442695
    %v947 = vpow.pop %v946
    %v948 = vmul.f32 %v923, 1.442695
    %v949 = vpow.pop %v948
    %v950 = vmul.f32 %v924, 1.442695
    %v951 = vpow.pop %v950
    %v952 = vmul.f32 %v925, 1.442695
    %v953 = vpow.pop %v952
    %v954 = vmul.f32 %v926, 1.442695
    %v955 = vpow.pop %v954
    %v956 = vmul.f32 %v927, 1.442695
    %v957 = vpow.pop %v956
    %v958 = vmul.f32 %v928, 1.442695
    %v959 = vpow.pop %v958
    %v960 = vmul.f32 %v929, 1.442695
    %v961 = vpow.pop %v960
    %962 = vadd.xlane.f32.xlu0 %v931
    %v963 = vpop.xlane.xlu0 %962
    %964 = vadd.xlane.f32.xlu0 %v933
    %v965 = vpop.xlane.xlu0 %964
    %966 = vadd.xlane.f32.xlu0 %v935
    %v967 = vpop.xlane.xlu0 %966
    %968 = vadd.xlane.f32.xlu0 %v937
    %v969 = vpop.xlane.xlu0 %968
    %970 = vadd.xlane.f32.xlu0 %v939
    %v971 = vpop.xlane.xlu0 %970
    %972 = vadd.xlane.f32.xlu0 %v941
    %v973 = vpop.xlane.xlu0 %972
    %974 = vadd.xlane.f32.xlu0 %v943
    %v975 = vpop.xlane.xlu0 %974
    %976 = vadd.xlane.f32.xlu0 %v945
    %v977 = vpop.xlane.xlu0 %976
    %978 = vadd.xlane.f32.xlu0 %v947
    %v979 = vpop.xlane.xlu0 %978
    %980 = vadd.xlane.f32.xlu0 %v949
    %v981 = vpop.xlane.xlu0 %980
    %982 = vadd.xlane.f32.xlu0 %v951
    %v983 = vpop.xlane.xlu0 %982
    %984 = vadd.xlane.f32.xlu0 %v953
    %v985 = vpop.xlane.xlu0 %984
    %986 = vadd.xlane.f32.xlu0 %v955
    %v987 = vpop.xlane.xlu0 %986
    %988 = vadd.xlane.f32.xlu0 %v957
    %v989 = vpop.xlane.xlu0 %988
    %990 = vadd.xlane.f32.xlu0 %v959
    %v991 = vpop.xlane.xlu0 %990
    %992 = vadd.xlane.f32.xlu0 %v961
    %v993 = vpop.xlane.xlu0 %992
    %v994 = vlog2.pop %v963
    %v995 = vmul.f32 %v994, 0.6931472
    %v996 = vlog2.pop %v965
    %v997 = vmul.f32 %v996, 0.6931472
    %v998 = vlog2.pop %v967
    %v999 = vmul.f32 %v998, 0.6931472
    %v1000 = vlog2.pop %v969
    %v1001 = vmul.f32 %v1000, 0.6931472
    %v1002 = vlog2.pop %v971
    %v1003 = vmul.f32 %v1002, 0.6931472
    %v1004 = vlog2.pop %v973
    %v1005 = vmul.f32 %v1004, 0.6931472
    %v1006 = vlog2.pop %v975
    %v1007 = vmul.f32 %v1006, 0.6931472
    %v1008 = vlog2.pop %v977
    %v1009 = vmul.f32 %v1008, 0.6931472
    %v1010 = vlog2.pop %v979
    %v1011 = vmul.f32 %v1010, 0.6931472
    %v1012 = vlog2.pop %v981
    %v1013 = vmul.f32 %v1012, 0.6931472
    %v1014 = vlog2.pop %v983
    %v1015 = vmul.f32 %v1014, 0.6931472
    %v1016 = vlog2.pop %v985
    %v1017 = vmul.f32 %v1016, 0.6931472
    %v1018 = vlog2.pop %v987
    %v1019 = vmul.f32 %v1018, 0.6931472
    %v1020 = vlog2.pop %v989
    %v1021 = vmul.f32 %v1020, 0.6931472
    %v1022 = vlog2.pop %v991
    %v1023 = vmul.f32 %v1022, 0.6931472
    %v1024 = vlog2.pop %v993
    %v1025 = vmul.f32 %v1024, 0.6931472
    %v1026 = vsub.f32 %v914, %v995
    %v1027 = vsub.f32 %v915, %v997
    %v1028 = vsub.f32 %v916, %v999
    %v1029 = vsub.f32 %v917, %v1001
    %v1030 = vsub.f32 %v918, %v1003
    %v1031 = vsub.f32 %v919, %v1005
    %v1032 = vsub.f32 %v920, %v1007
    %v1033 = vsub.f32 %v921, %v1009
    %v1034 = vsub.f32 %v922, %v1011
    %v1035 = vsub.f32 %v923, %v1013
    %v1036 = vsub.f32 %v924, %v1015
    %v1037 = vsub.f32 %v925, %v1017
    %v1038 = vsub.f32 %v926, %v1019
    %v1039 = vsub.f32 %v927, %v1021
    %v1040 = vsub.f32 %v928, %v1023
    %v1041 = vsub.f32 %v929, %v1025
    %1042 = vst [vmem:[#allocation12] sm:$0xff] %v1026
    %1043 = vst [vmem:[#allocation12 + $0x8] sm:$0xff] %v1027
    %1044 = vst [vmem:[#allocation12 + $0x10] sm:$0xff] %v1028
    %1045 = vst [vmem:[#allocation12 + $0x18] sm:$0xff] %v1029
    %1046 = vst [vmem:[#allocation12 + $0x20] sm:$0xff] %v1030
    %1047 = vst [vmem:[#allocation12 + $0x28] sm:$0xff] %v1031
    %1048 = vst [vmem:[#allocation12 + $0x30] sm:$0xff] %v1032
    %1049 = vst [vmem:[#allocation12 + $0x38] sm:$0xff] %v1033
    %1050 = vst [vmem:[#allocation12 + $0x40] sm:$0xff] %v1034
    %1051 = vst [vmem:[#allocation12 + $0x48] sm:$0xff] %v1035
    %1052 = vst [vmem:[#allocation12 + $0x50] sm:$0xff] %v1036
    %1053 = vst [vmem:[#allocation12 + $0x58] sm:$0xff] %v1037
    %1054 = vst [vmem:[#allocation12 + $0x60] sm:$0xff] %v1038
    %1055 = vst [vmem:[#allocation12 + $0x68] sm:$0xff] %v1039
    %1056 = vst [vmem:[#allocation12 + $0x70] sm:$0xff] %v1040
    %1057 = vst [vmem:[#allocation12 + $0x78] sm:$0xff] %v1041
    // Predicated region
    $region38: #{tpu_custom_call.1} parent=1 // pred_check
      _
    $region39: #{tpu_custom_call.1} parent=1 // pred_check_branch
      %1059 = sbr.rel (0) target = $region41
    $region40: #{tpu_custom_call.1} parent=1 // pred_region
      %s1061 = ssub.s32 2048, 2048
      %1062 = vsyncadd [#allocation8], %s1061
      %s1063 = sshll.u32 [#allocation12], 4
      %s1064 = int_to_ptr.vmem [resolvable:$true] %s1063
      %1069 = dma.vmem_to_hbm [thread:$0]  %s1064, 2048, %s6, [#allocation8], 128, 128, 8
    $region41: #{tpu_custom_call.1} parent=1 // pred_fallthru
      _
    // Predicated region
    $region42: #{tpu_custom_call.1} parent=1 // pred_check
      _
    $region43: #{tpu_custom_call.1} parent=1 // pred_check_branch
      %1071 = sbr.rel (0) target = $region45
    $region44: #{tpu_custom_call.1} parent=1 // pred_region
      %1072 = dma.done [#allocation8], 2048
    $region45: #{tpu_custom_call.1} parent=1 // pred_fallthru
      _
    %1073 = vsyncpa [#allocation7], 1
    %1074 = vsyncpa [#allocation10], 1
    %1075 = vsyncpa [#allocation8], 1
  %1076 = vsyncmov [#allocation5]
  %s1077 = vpop.sfrf %1076
  %p1078 = scmp.eq.s32.totalorder %s1077, 0
  %p1079 = pneg %p1078
  %1081 = shalt.err (%p1079)

</llo_original>
